<compile_context>
chip_gen: v7x
topology: tpu7x:2x2x1
jax: 0.10.0
libtpu: 0.0.40
codegen_flags: <defaults>
</compile_context>

<pallas_src>
import jax
import jax.numpy as jnp
from jax.experimental import pallas as pl
from jax.experimental.pallas import tpu as pltpu

BN_EPS = 1e-5
LANE = 128
SUBLANE = 8


def _round_up(x, m):
    return ((x + m - 1) // m) * m


def _vmem_limit_bytes():
    """~3/4 of physical VMEM: ~48 MiB on v7x, ~96 MiB on v5e/v6e."""
    default_cap = 64 * 1024 * 1024          # conservative (v7x physical VMEM)
    try:
        info = pltpu.get_tpu_info()
        cap = int(getattr(info, "vmem_capacity_bytes", default_cap))
    except Exception:
        cap = default_cap
    return int(max(32 * 1024 * 1024, min((cap * 3) // 4, 100 * 1024 * 1024)))


def _pick_images_per_step(N, H, W, Cin, Cout, Cp, vmem_limit):
    """Images per grid step: as many as the VMEM budget allows, kept to >= 2
    grid steps (when N >= 2) for v7x megacore balance, and Nb | N so every
    per-tile BN statistic is over real rows only (no padded images)."""
    Hp, Wp = H + 2, W + 2
    per_img = (
        Hp * _round_up(Wp, SUBLANE) * _round_up(Cin, LANE) * 2        # x block (bf16)
        + H * _round_up(W, SUBLANE) * _round_up(Cout, LANE) * 2       # out block (bf16)
        + H * _round_up(W, SUBLANE) * _round_up(9 * Cin, LANE) * 2    # im2col scratch
        + H * W * Cp * 4                                              # f32 conv values
    )
    budget = vmem_limit // 4                # double-buffered pipeline + headroom
    cap = max(1, budget // max(per_img, 1))
    if N >= 2:
        cap = min(cap, N // 2)              # keep >= 2 grid steps for 2 TensorCores
    cap = int(max(1, min(cap, N)))
    nb = 1
    for d in range(1, cap + 1):
        if N % d == 0:
            nb = d
    return nb


def _conv3x3_im2col(x_ref, w_ref, patch_ref):
    """3x3 'same' conv on a halo-padded block via ONE K=9*Cin MXU matmul.

    x_ref     : (Nb, H+2, W+2, Cin) bf16 VMEM block (halo baked in)
    w_ref     : (9*Cin, Cp)         bf16 VMEM block (row = (kh*3+kw)*Cin + c)
    patch_ref : (Nb, H, W, 9*Cin)   bf16 VMEM scratch (in-VMEM im2col)
    returns (Nb*H*W, Cp) float32 conv output WITHOUT bias (bias cancels in BN).
    """
    Nb, Hp, Wp, Cin = x_ref.shape
    H, W = Hp - 2, Wp - 2
    t = 0
    for dh in range(3):
        for dw in range(3):
            patch_ref[:, :, :, t * Cin:(t + 1) * Cin] = \
                x_ref[:, dh:dh + H, dw:dw + W, :]
            t += 1
    patch = patch_ref[...].reshape(Nb * H * W, 9 * Cin)
    return jnp.dot(patch, w_ref[...], preferred_element_type=jnp.float32)


def _stats_kernel(x_ref, w_ref, stats_ref, patch_ref):
    # Pass 1: per-tile sum and *centered* sum-of-squares of the conv output,
    # per channel.  Tiles are pooled with Chan's formula in JAX glue, which
    # avoids the E[x^2]-E[x]^2 cancellation of the previous version.
    z = _conv3x3_im2col(x_ref, w_ref, patch_ref)            # (rows, Cp) f32
    rows, Cp = z.shape
    s = jnp.sum(z, axis=0, keepdims=True)                   # (1, Cp)
    d = z - s * (1.0 / rows)
    m2 = jnp.sum(d * d, axis=0, keepdims=True)              # (1, Cp)
    stats_ref[:, 0:1, :] = s.reshape(1, 1, Cp)              # two row stores,
    stats_ref[:, 1:2, :] = m2.reshape(1, 1, Cp)             # no concat relayout


def _bn_relu_kernel(x_ref, w_ref, shift_ref, o_ref, patch_ref):
    # Pass 2: recompute the cheap conv with the BN scale pre-folded into the
    # weight (host side), add the fused shift, ReLU, and write a slim bf16
    # block with the channel padding already sliced off.
    Nb, H, W, Cout = o_ref.shape
    z = _conv3x3_im2col(x_ref, w_ref, patch_ref)            # already scaled
    out = jnp.maximum(z + shift_ref[...], 0.0)              # (rows, Cp) f32
    o_ref[...] = out[:, :Cout].astype(o_ref.dtype).reshape(Nb, H, W, Cout)


def conv_block(x_nchw, weight, bias, gamma, beta):
    """ConvBlock forward: Conv2d(3x3, pad=1) + BatchNorm2d(train stats) + ReLU.

    x_nchw : (N, Cin, H, W) f32
    weight : (Cout, Cin, 3, 3) f32 (PyTorch layout)
    bias   : (Cout,) f32 — cancels exactly under training-mode BN mean
             subtraction, so it is folded away (no in-kernel add).
    gamma, beta : (Cout,) f32
    returns (N, Cout, H, W) f32
    """
    del bias  # cancels under training-mode BatchNorm
    N, Cin, H, W = x_nchw.shape
    Cout = weight.shape[0]
    Cp = _round_up(Cout, LANE)               # lane-dense matmul output width
    Hp, Wp = H + 2, W + 2

    vmem_limit = _vmem_limit_bytes()
    Nb = _pick_images_per_step(N, H, W, Cin, Cout, Cp, vmem_limit)
    n_steps = N // Nb

    # NHWC + 1-px halo, bf16 activations (f32 accumulation in-kernel).
    x_nhwc = jnp.transpose(x_nchw, (0, 2, 3, 1)).astype(jnp.bfloat16)
    xp = jnp.pad(x_nhwc, ((0, 0), (1, 1), (1, 1), (0, 0)))        # (N, Hp, Wp, Cin)

    # weight (Cout,Cin,3,3) -> (9*Cin, Cp): row = (kh*3+kw)*Cin + c, matching
    # the in-kernel im2col tap order; zero-pad Cout up to 128 lanes.
    w_f32 = jnp.transpose(weight, (2, 3, 1, 0)).reshape(9 * Cin, Cout)
    w_f32 = jnp.pad(w_f32, ((0, 0), (0, Cp - Cout)))
    w_bf16 = w_f32.astype(jnp.bfloat16)

    cparams = pltpu.CompilerParams(
        dimension_semantics=("parallel",),   # split image blocks across TCs
        vmem_limit_bytes=vmem_limit,
    )
    x_spec = pl.BlockSpec((Nb, Hp, Wp, Cin), lambda i: (i, 0, 0, 0))
    w_spec = pl.BlockSpec((9 * Cin, Cp), lambda i: (0, 0))        # resident weight
    patch_scratch = pltpu.VMEM((Nb, H, W, 9 * Cin), jnp.bfloat16)

    # ---- pass 1: per-tile (sum, centered sum-of-squares) of conv output ----
    stats = pl.pallas_call(
        _stats_kernel,
        grid=(n_steps,),
        in_specs=[x_spec, w_spec],
        out_specs=pl.BlockSpec((1, 2, Cp), lambda i: (i, 0, 0)),
        out_shape=jax.ShapeDtypeStruct((n_steps, 2, Cp), jnp.float32),
        scratch_shapes=[patch_scratch],
        compiler_params=cparams,
    )(xp, w_bf16)

    # ---- tiny JAX glue: pooled batch stats -> scale folded into weight + shift
    cnt_t = jnp.float32(Nb * H * W)
    total = jnp.float32(N * H * W)
    sum_t, m2_t = stats[:, 0, :], stats[:, 1, :]                  # (n_steps, Cp)
    mean_t = sum_t / cnt_t
    mean = jnp.sum(sum_t, axis=0) / total
    var = (jnp.sum(m2_t, axis=0)
           + cnt_t * jnp.sum((mean_t - mean) ** 2, axis=0)) / total
    inv = jax.lax.rsqrt(jnp.maximum(var, 0.0) + BN_EPS)
    g = jnp.pad(gamma.astype(jnp.float32), (0, Cp - Cout))
    b = jnp.pad(beta.astype(jnp.float32), (0, Cp - Cout))
    scale = g * inv                                               # (Cp,)
    shift = (b - mean * scale).reshape(1, Cp)
    w2_bf16 = (w_f32 * scale[None, :]).astype(jnp.bfloat16)       # fold BN scale

    # ---- pass 2: recompute conv (cheap for small Cin) + shift + ReLU -------
    out_nhwc = pl.pallas_call(
        _bn_relu_kernel,
        grid=(n_steps,),
        in_specs=[x_spec, w_spec, pl.BlockSpec((1, Cp), lambda i: (0, 0))],
        out_specs=pl.BlockSpec((Nb, H, W, Cout), lambda i: (i, 0, 0, 0)),
        out_shape=jax.ShapeDtypeStruct((N, H, W, Cout), jnp.bfloat16),
        scratch_shapes=[patch_scratch],
        compiler_params=cparams,
    )(xp, w2_bf16, shift)

    # back to NCHW f32 (cast fuses into the single wrapper transpose)
    return jnp.transpose(out_nhwc.astype(jnp.float32), (0, 3, 1, 2))


def _reference(x_nchw, weight, bias, gamma, beta):
    """Pure-JAX f32 reference matching PyTorch ConvBlock forward (training BN)."""
    y = jax.lax.conv_general_dilated(
        x_nchw, weight, window_strides=(1, 1), padding=((1, 1), (1, 1)),
        dimension_numbers=("NCHW", "OIHW", "NCHW"))
    y = y + bias[None, :, None, None]
    mean = jnp.mean(y, axis=(0, 2, 3), keepdims=True)
    var = jnp.mean((y - mean) ** 2, axis=(0, 2, 3), keepdims=True)
    y = (y - mean) * jax.lax.rsqrt(var + BN_EPS)
    y = y * gamma[None, :, None, None] + beta[None, :, None, None]
    return jnp.maximum(y, 0.0)


if __name__ == "__main__":
    key = jax.random.PRNGKey(0)
    k_x, k_w, k_b = jax.random.split(key, 3)

    N, Cin, H, W = 2, 4, 16, 16
    Cout, K = 8, 3

    x = jax.random.normal(k_x, (N, Cin, H, W), dtype=jnp.float32)

    # Deterministic parameter init (shapes match nn.Conv2d / nn.BatchNorm2d).
    fan_in = Cin * K * K
    bound = 1.0 / jnp.sqrt(jnp.float32(fan_in))
    weight = jax.random.uniform(k_w, (Cout, Cin, K, K), jnp.float32, -bound, bound)
    bias = jax.random.uniform(k_b, (Cout,), jnp.float32, -bound, bound)
    gamma = jnp.ones((Cout,), jnp.float32)    # BatchNorm2d default weight
    beta = jnp.zeros((Cout,), jnp.float32)    # BatchNorm2d default bias

    out = jax.block_until_ready(conv_block(x, weight, bias, gamma, beta))
    ref = jax.block_until_ready(_reference(x, weight, bias, gamma, beta))

    assert out.shape == (N, Cout, H, W)
    # Tolerance covers bf16 MXU inputs, bf16 scale-folded weights and the bf16
    # output store (f32 accumulation throughout); normalized outputs are O(1).
    assert jnp.allclose(out, ref, atol=5e-2, rtol=5e-2), "mismatch vs reference"

    print("KERNEL_OK")
</pallas_src>

<mosaic_0001>
module attributes {stable_mosaic.version = 11 : i64} {
  func.func @_stats_kernel(%arg0: i32, %arg1: memref<1x18x18x4xbf16, #tpu.memory_space<vmem>>, %arg2: memref<36x128xbf16, #tpu.memory_space<vmem>>, %arg3: memref<1x2x128xf32, #tpu.memory_space<vmem>>, %arg4: memref<1x16x16x36xbf16, #tpu.memory_space<vmem>>) attributes {dimension_semantics = [#tpu.dimension_semantics<parallel>], iteration_bounds = array<i64: 2>, scalar_prefetch = 0 : i64, scratch_operands = 1 : i64, tpu.core_type = #tpu.core_type<tc>, window_params = [{transform_indices = @transform_0, window_bounds = array<i64: 1, 18, 18, 4>}, {pipeline_mode = #tpu.pipeline_mode<synchronous>, transform_indices = @transform_1, window_bounds = array<i64: 36, 128>}, {transform_indices = @transform_2, window_bounds = array<i64: 1, 2, 128>}]} {
    %c0 = arith.constant 0 : index
    %c0_0 = arith.constant 0 : index
    %c0_1 = arith.constant 0 : index
    %c0_2 = arith.constant 0 : index
    %0 = vector.load %arg1[%c0, %c0_0, %c0_1, %c0_2] : memref<1x18x18x4xbf16, #tpu.memory_space<vmem>>, vector<1x16x16x4xbf16>
    %c0_3 = arith.constant 0 : index
    %c0_4 = arith.constant 0 : index
    %c0_5 = arith.constant 0 : index
    %c0_6 = arith.constant 0 : index
    %1 = vector.load %arg4[%c0_3, %c0_4, %c0_5, %c0_6] : memref<1x16x16x36xbf16, #tpu.memory_space<vmem>>, vector<1x16x16x4xbf16>
    tpu.vector_store %arg4[%c0_3, %c0_4, %c0_5, %c0_6], %0 {strides = array<i32>} : memref<1x16x16x36xbf16, #tpu.memory_space<vmem>>, vector<1x16x16x4xbf16>,
    %c0_7 = arith.constant 0 : index
    %c0_8 = arith.constant 0 : index
    %c1 = arith.constant 1 : index
    %c0_9 = arith.constant 0 : index
    %2 = vector.load %arg1[%c0_7, %c0_8, %c1, %c0_9] : memref<1x18x18x4xbf16, #tpu.memory_space<vmem>>, vector<1x16x16x4xbf16>
    %c0_10 = arith.constant 0 : index
    %c0_11 = arith.constant 0 : index
    %c0_12 = arith.constant 0 : index
    %c4 = arith.constant 4 : index
    %3 = vector.load %arg4[%c0_10, %c0_11, %c0_12, %c4] : memref<1x16x16x36xbf16, #tpu.memory_space<vmem>>, vector<1x16x16x4xbf16>
    tpu.vector_store %arg4[%c0_10, %c0_11, %c0_12, %c4], %2 {strides = array<i32>} : memref<1x16x16x36xbf16, #tpu.memory_space<vmem>>, vector<1x16x16x4xbf16>,
    %c0_13 = arith.constant 0 : index
    %c0_14 = arith.constant 0 : index
    %c2 = arith.constant 2 : index
    %c0_15 = arith.constant 0 : index
    %4 = vector.load %arg1[%c0_13, %c0_14, %c2, %c0_15] : memref<1x18x18x4xbf16, #tpu.memory_space<vmem>>, vector<1x16x16x4xbf16>
    %c0_16 = arith.constant 0 : index
    %c0_17 = arith.constant 0 : index
    %c0_18 = arith.constant 0 : index
    %c8 = arith.constant 8 : index
    %5 = vector.load %arg4[%c0_16, %c0_17, %c0_18, %c8] : memref<1x16x16x36xbf16, #tpu.memory_space<vmem>>, vector<1x16x16x4xbf16>
    tpu.vector_store %arg4[%c0_16, %c0_17, %c0_18, %c8], %4 {strides = array<i32>} : memref<1x16x16x36xbf16, #tpu.memory_space<vmem>>, vector<1x16x16x4xbf16>,
    %c0_19 = arith.constant 0 : index
    %c1_20 = arith.constant 1 : index
    %c0_21 = arith.constant 0 : index
    %c0_22 = arith.constant 0 : index
    %6 = vector.load %arg1[%c0_19, %c1_20, %c0_21, %c0_22] : memref<1x18x18x4xbf16, #tpu.memory_space<vmem>>, vector<1x16x16x4xbf16>
    %c0_23 = arith.constant 0 : index
    %c0_24 = arith.constant 0 : index
    %c0_25 = arith.constant 0 : index
    %c12 = arith.constant 12 : index
    %7 = vector.load %arg4[%c0_23, %c0_24, %c0_25, %c12] : memref<1x16x16x36xbf16, #tpu.memory_space<vmem>>, vector<1x16x16x4xbf16>
    tpu.vector_store %arg4[%c0_23, %c0_24, %c0_25, %c12], %6 {strides = array<i32>} : memref<1x16x16x36xbf16, #tpu.memory_space<vmem>>, vector<1x16x16x4xbf16>,
    %c0_26 = arith.constant 0 : index
    %c1_27 = arith.constant 1 : index
    %c1_28 = arith.constant 1 : index
    %c0_29 = arith.constant 0 : index
    %8 = vector.load %arg1[%c0_26, %c1_27, %c1_28, %c0_29] : memref<1x18x18x4xbf16, #tpu.memory_space<vmem>>, vector<1x16x16x4xbf16>
    %c0_30 = arith.constant 0 : index
    %c0_31 = arith.constant 0 : index
    %c0_32 = arith.constant 0 : index
    %c16 = arith.constant 16 : index
    %9 = vector.load %arg4[%c0_30, %c0_31, %c0_32, %c16] : memref<1x16x16x36xbf16, #tpu.memory_space<vmem>>, vector<1x16x16x4xbf16>
    tpu.vector_store %arg4[%c0_30, %c0_31, %c0_32, %c16], %8 {strides = array<i32>} : memref<1x16x16x36xbf16, #tpu.memory_space<vmem>>, vector<1x16x16x4xbf16>,
    %c0_33 = arith.constant 0 : index
    %c1_34 = arith.constant 1 : index
    %c2_35 = arith.constant 2 : index
    %c0_36 = arith.constant 0 : index
    %10 = vector.load %arg1[%c0_33, %c1_34, %c2_35, %c0_36] : memref<1x18x18x4xbf16, #tpu.memory_space<vmem>>, vector<1x16x16x4xbf16>
    %c0_37 = arith.constant 0 : index
    %c0_38 = arith.constant 0 : index
    %c0_39 = arith.constant 0 : index
    %c20 = arith.constant 20 : index
    %11 = vector.load %arg4[%c0_37, %c0_38, %c0_39, %c20] : memref<1x16x16x36xbf16, #tpu.memory_space<vmem>>, vector<1x16x16x4xbf16>
    tpu.vector_store %arg4[%c0_37, %c0_38, %c0_39, %c20], %10 {strides = array<i32>} : memref<1x16x16x36xbf16, #tpu.memory_space<vmem>>, vector<1x16x16x4xbf16>,
    %c0_40 = arith.constant 0 : index
    %c2_41 = arith.constant 2 : index
    %c0_42 = arith.constant 0 : index
    %c0_43 = arith.constant 0 : index
    %12 = vector.load %arg1[%c0_40, %c2_41, %c0_42, %c0_43] : memref<1x18x18x4xbf16, #tpu.memory_space<vmem>>, vector<1x16x16x4xbf16>
    %c0_44 = arith.constant 0 : index
    %c0_45 = arith.constant 0 : index
    %c0_46 = arith.constant 0 : index
    %c24 = arith.constant 24 : index
    %13 = vector.load %arg4[%c0_44, %c0_45, %c0_46, %c24] : memref<1x16x16x36xbf16, #tpu.memory_space<vmem>>, vector<1x16x16x4xbf16>
    tpu.vector_store %arg4[%c0_44, %c0_45, %c0_46, %c24], %12 {strides = array<i32>} : memref<1x16x16x36xbf16, #tpu.memory_space<vmem>>, vector<1x16x16x4xbf16>,
    %c0_47 = arith.constant 0 : index
    %c2_48 = arith.constant 2 : index
    %c1_49 = arith.constant 1 : index
    %c0_50 = arith.constant 0 : index
    %14 = vector.load %arg1[%c0_47, %c2_48, %c1_49, %c0_50] : memref<1x18x18x4xbf16, #tpu.memory_space<vmem>>, vector<1x16x16x4xbf16>
    %c0_51 = arith.constant 0 : index
    %c0_52 = arith.constant 0 : index
    %c0_53 = arith.constant 0 : index
    %c28 = arith.constant 28 : index
    %15 = vector.load %arg4[%c0_51, %c0_52, %c0_53, %c28] : memref<1x16x16x36xbf16, #tpu.memory_space<vmem>>, vector<1x16x16x4xbf16>
    tpu.vector_store %arg4[%c0_51, %c0_52, %c0_53, %c28], %14 {strides = array<i32>} : memref<1x16x16x36xbf16, #tpu.memory_space<vmem>>, vector<1x16x16x4xbf16>,
    %c0_54 = arith.constant 0 : index
    %c2_55 = arith.constant 2 : index
    %c2_56 = arith.constant 2 : index
    %c0_57 = arith.constant 0 : index
    %16 = vector.load %arg1[%c0_54, %c2_55, %c2_56, %c0_57] : memref<1x18x18x4xbf16, #tpu.memory_space<vmem>>, vector<1x16x16x4xbf16>
    %c0_58 = arith.constant 0 : index
    %c0_59 = arith.constant 0 : index
    %c0_60 = arith.constant 0 : index
    %c32 = arith.constant 32 : index
    %17 = vector.load %arg4[%c0_58, %c0_59, %c0_60, %c32] : memref<1x16x16x36xbf16, #tpu.memory_space<vmem>>, vector<1x16x16x4xbf16>
    tpu.vector_store %arg4[%c0_58, %c0_59, %c0_60, %c32], %16 {strides = array<i32>} : memref<1x16x16x36xbf16, #tpu.memory_space<vmem>>, vector<1x16x16x4xbf16>,
    %c0_61 = arith.constant 0 : index
    %c0_62 = arith.constant 0 : index
    %c0_63 = arith.constant 0 : index
    %c0_64 = arith.constant 0 : index
    %18 = vector.load %arg4[%c0_61, %c0_62, %c0_63, %c0_64] : memref<1x16x16x36xbf16, #tpu.memory_space<vmem>>, vector<1x16x16x36xbf16>
    %19 = vector.shape_cast %18 : vector<1x16x16x36xbf16> to vector<256x36xbf16>
    %c0_65 = arith.constant 0 : index
    %c0_66 = arith.constant 0 : index
    %20 = vector.load %arg2[%c0_65, %c0_66] : memref<36x128xbf16, #tpu.memory_space<vmem>>, vector<36x128xbf16>
    %cst = arith.constant dense<0.000000e+00> : vector<256x128xf32>
    %21 = tpu.matmul %19, %20, %cst {dimension_numbers = #tpu.dot_dimension_numbers<[1], [0], [0], [1], [0, 0, 1, 1], [], []>} : vector<256x36xbf16>, vector<36x128xbf16>, vector<256x128xf32> -> vector<256x128xf32>
    %cst_67 = arith.constant dense<0.000000e+00> : vector<128xf32>
    %22 = vector.multi_reduction <add>, %21, %cst_67 [0] : vector<256x128xf32> to vector<128xf32>
    %23 = vector.shape_cast %22 : vector<128xf32> to vector<1x128xf32>
    %cst_68 = arith.constant 3.906250e-03 : f32
    %24 = vector.broadcast %cst_68 : f32 to vector<1x128xf32>
    %25 = arith.mulf %23, %24 : vector<1x128xf32>
    %26 = vector.broadcast %25 : vector<1x128xf32> to vector<256x128xf32>
    %27 = arith.subf %21, %26 : vector<256x128xf32>
    %28 = arith.mulf %27, %27 : vector<256x128xf32>
    %cst_69 = arith.constant dense<0.000000e+00> : vector<128xf32>
    %29 = vector.multi_reduction <add>, %28, %cst_69 [0] : vector<256x128xf32> to vector<128xf32>
    %30 = vector.shape_cast %29 : vector<128xf32> to vector<1x128xf32>
    %31 = vector.shape_cast %23 : vector<1x128xf32> to vector<1x1x128xf32>
    %c0_70 = arith.constant 0 : index
    %c0_71 = arith.constant 0 : index
    %c0_72 = arith.constant 0 : index
    %32 = vector.load %arg3[%c0_70, %c0_71, %c0_72] : memref<1x2x128xf32, #tpu.memory_space<vmem>>, vector<1x1x128xf32>
    tpu.vector_store %arg3[%c0_70, %c0_71, %c0_72], %31 {strides = array<i32>} : memref<1x2x128xf32, #tpu.memory_space<vmem>>, vector<1x1x128xf32>,
    %33 = vector.shape_cast %30 : vector<1x128xf32> to vector<1x1x128xf32>
    %c0_73 = arith.constant 0 : index
    %c1_74 = arith.constant 1 : index
    %c0_75 = arith.constant 0 : index
    %34 = vector.load %arg3[%c0_73, %c1_74, %c0_75] : memref<1x2x128xf32, #tpu.memory_space<vmem>>, vector<1x1x128xf32>
    tpu.vector_store %arg3[%c0_73, %c1_74, %c0_75], %33 {strides = array<i32>} : memref<1x2x128xf32, #tpu.memory_space<vmem>>, vector<1x1x128xf32>,
    return
  }
  func.func @transform_0(%arg0: i32) -> (i32, i32, i32, i32) {
    %c0_i32 = arith.constant 0 : i32
    %c0_i32_0 = arith.constant 0 : i32
    %c0_i32_1 = arith.constant 0 : i32
    %c0_i32_2 = arith.constant 0 : i32
    return %arg0, %c0_i32, %c0_i32_0, %c0_i32_1 : i32, i32, i32, i32
  }
  func.func @transform_1(%arg0: i32) -> (i32, i32) {
    %c0_i32 = arith.constant 0 : i32
    %c0_i32_0 = arith.constant 0 : i32
    %c0_i32_1 = arith.constant 0 : i32
    return %c0_i32, %c0_i32_0 : i32, i32
  }
  func.func @transform_2(%arg0: i32) -> (i32, i32, i32) {
    %c0_i32 = arith.constant 0 : i32
    %c0_i32_0 = arith.constant 0 : i32
    %c0_i32_1 = arith.constant 0 : i32
    return %arg0, %c0_i32, %c0_i32_0 : i32, i32, i32
  }
}

</mosaic_0001>

<llo_original>
// kernel: tpu_custom_call.1
$region0: #{tpu_custom_call.1}
  #allocation0 [shape = 'u32[]', space=smem, size = 0x4, offset = 0x4, fixed_abs, tag = 'smem constant byte address 0x4 - core index']
  #allocation1 [shape = 'u32[144,128]{1,0:T(1,128)}', space=vmem, size = 0x12000, scoped, tag = 'internal scratch']
  #allocation2 [shape = 'bf16[1,16,16,36]{3,2,1,0:T(16,128)(2,1)}', space=vmem, size = 0x10000, scoped, tag = 'scratch operand']
  %s0 = inlined_call_operand.vmem [shape: bf16[2,18,18,4], index: 0, kind: input, shape index: {}]
  %s1 = inlined_call_operand.vmem [shape: bf16[36,128], index: 1, kind: input, shape index: {}]
  %s2 = inlined_call_operand.hbm [shape: f32[2,2,128], index: 2, kind: output, shape index: {}]
  %s3 = sld [smem:[#allocation0]]
  $region41: #{tpu_custom_call.1} parent=0
    _
  %s5 = ssub.s32 1, %s3
  %s6 = scalar_select 0, %s5, %s3
  $region1: #{tpu_custom_call.1} parent=0
    #allocation3 [shape = 'u8[2048]{0}', space=vmem, size = 0x800, scoped, tag = 'output window, operand 0']
    #allocation4 [shape = 's32[2]{0}', space=sflag, size = 0x8, scoped, tag = 'scoped memory for tpu_custom_call.1']
    %7 = vsyncpa [#allocation4], 0
    %s8 = scalar_lea.sflag [#allocation4], 1
    %9 = vsyncpa %s8, 0
    loop: start=0, step=1, limit=4
    $region2: #{tpu_custom_call.1} parent=1 // loop_pre_header
      _
    $region3: #{tpu_custom_call.1} parent=1 // loop_header
      %s11 = sphi 0, %s15
      %p12 = scmp.ge.s32.totalorder %s11, 4
      %s21 = sphi 0, %s23
      %s24 = sphi 0, %s21
      %s25 = sphi 0, %s24
      %s41 = sphi 0, %s25
      %s45 = sphi 0, %s45
      %s47 = sphi 0, %s45
      %s48 = sphi 0, %s47
      %s62 = sphi 0, %s48
      %s68 = sphi 0, %s70
      %s71 = sphi 0, %s68
      %s72 = sphi 0, %s71
      %s88 = sphi 0, %s72
    $region4: #{tpu_custom_call.1} parent=1 // loop_header_branch
      %14 = sbr.rel (%p12) target = $region8
    $region5: #{tpu_custom_call.1} parent=1 // loop_body
      %s16 = ssub.s32 %s11, 1
      %s17 = ssub.s32 %s11, 2
      %s18 = sadd.s32 %s11, 1
      %s19 = ssub.s32 %s11, %s18
      %p20 = scmp.eq.s32.totalorder %s19, 0
      %s22 = sadd.s32 %s21, 1
      %s23 = scalar_select %p20, %s21, %s22
      %p26 = pneg %p20
      %p27 = scmp.eq.s32.totalorder %s11, 1
      %p28 = por %p26, %p27
      %p29 = scmp.ne.s32.totalorder %s21, %s24
      %p30 = scmp.eq.s32.totalorder %s11, 0
      %p31 = por %p29, %p30
      %p32 = scmp.ne.s32.totalorder %s21, %s24
      %p33 = scmp.eq.s32.totalorder %s16, 1
      %p34 = por %p32, %p33
      %p35 = scmp.ne.s32.totalorder %s24, %s25
      %p36 = scmp.eq.s32.totalorder %s16, 0
      %p37 = por %p35, %p36
      %p38 = scmp.ne.s32.totalorder %s24, %s25
      %p39 = scmp.eq.s32.totalorder %s17, 1
      %p40 = por %p38, %p39
      %p42 = scmp.ne.s32.totalorder %s25, %s41
      %p43 = scmp.eq.s32.totalorder %s17, 0
      %p44 = por %p42, %p43
      %s46 = sadd.s32 %s45, 1
      %p49 = scmp.eq.s32.totalorder %s11, 1
      %p50 = scmp.ne.s32.totalorder %s45, %s47
      %p51 = scmp.eq.s32.totalorder %s11, 0
      %p52 = por %p50, %p51
      %p53 = scmp.ne.s32.totalorder %s45, %s47
      %p54 = scmp.eq.s32.totalorder %s16, 1
      %p55 = por %p53, %p54
      %p56 = scmp.ne.s32.totalorder %s47, %s48
      %p57 = scmp.eq.s32.totalorder %s16, 0
      %p58 = por %p56, %p57
      %p59 = scmp.ne.s32.totalorder %s47, %s48
      %p60 = scmp.eq.s32.totalorder %s17, 1
      %p61 = por %p59, %p60
      %p63 = scmp.ne.s32.totalorder %s48, %s62
      %p64 = scmp.eq.s32.totalorder %s17, 0
      %p65 = por %p63, %p64
      %s66 = ssub.s32 %s11, %s18
      %p67 = scmp.eq.s32.totalorder %s66, 0
      %s69 = sadd.s32 %s68, 1
      %s70 = scalar_select %p67, %s68, %s69
      %p73 = pneg %p67
      %p74 = scmp.eq.s32.totalorder %s11, 1
      %p75 = por %p73, %p74
      %p76 = scmp.ne.s32.totalorder %s68, %s71
      %p77 = scmp.eq.s32.totalorder %s11, 0
      %p78 = por %p76, %p77
      %p79 = scmp.ne.s32.totalorder %s68, %s71
      %p80 = scmp.eq.s32.totalorder %s16, 1
      %p81 = por %p79, %p80
      %p82 = scmp.ne.s32.totalorder %s71, %s72
      %p83 = scmp.eq.s32.totalorder %s16, 0
      %p84 = por %p82, %p83
      %p85 = scmp.ne.s32.totalorder %s71, %s72
      %p86 = scmp.eq.s32.totalorder %s17, 1
      %p87 = por %p85, %p86
      %p89 = scmp.ne.s32.totalorder %s72, %s88
      %p90 = scmp.eq.s32.totalorder %s17, 0
      %p91 = por %p89, %p90
      %p92 = scmp.le.s32.totalorder 1, %s11
      %p93 = scmp.lt.s32.totalorder %s11, 3
      %p94 = pnand %p92, %p93
      %p95 = pneg %p94
      // Predicated region
      $region9: #{tpu_custom_call.1} parent=5 // pred_check
        _
      $region10: #{tpu_custom_call.1} parent=5 // pred_check_branch
        %97 = sbr.rel (%p94) target = $region12
      $region11: #{tpu_custom_call.1} parent=5 // pred_region
        %s98 = ssub.s32 %s11, 1
        // Predicated region
        $region13: #{tpu_custom_call.1} parent=11 // pred_check
          %p99 = pneg %p58
        $region14: #{tpu_custom_call.1} parent=11 // pred_check_branch
          %101 = sbr.rel (%p99) target = $region16
        $region15: #{tpu_custom_call.1} parent=11 // pred_region
          _
        $region16: #{tpu_custom_call.1} parent=11 // pred_fallthru
          _
      $region12: #{tpu_custom_call.1} parent=5 // pred_fallthru
        _
      %p102 = scmp.lt.s32.totalorder %s11, 2
      // Predicated region
      $region17: #{tpu_custom_call.1} parent=5 // pred_check
        %p103 = pneg %p102
      $region18: #{tpu_custom_call.1} parent=5 // pred_check_branch
        %105 = sbr.rel (%p103) target = $region20
      $region19: #{tpu_custom_call.1} parent=5 // pred_region
        // Predicated region
        $region21: #{tpu_custom_call.1} parent=19 // pred_check
          %p106 = pneg %p31
        $region22: #{tpu_custom_call.1} parent=19 // pred_check_branch
          %108 = sbr.rel (%p106) target = $region24
        $region23: #{tpu_custom_call.1} parent=19 // pred_region
          %p109 = scmp.lt.s32.totalorder %s11, 1
          %s110 = scalar_select %p109, %s11, 1
          %s111 = smul.addr %s110, 54
          %s112 = smul.addr %s111, 4
          %s113 = scalar_lea.vmem %s0, %s112
        $region24: #{tpu_custom_call.1} parent=19 // pred_fallthru
          _
      $region20: #{tpu_custom_call.1} parent=5 // pred_fallthru
        _
      %p114 = scmp.le.s32.totalorder 1, %s11
      %p115 = scmp.lt.s32.totalorder %s11, 3
      %p116 = pnand %p114, %p115
      %p117 = pneg %p116
      // Predicated region
      $region25: #{tpu_custom_call.1} parent=5 // pred_check
        _
      $region26: #{tpu_custom_call.1} parent=5 // pred_check_branch
        %119 = sbr.rel (%p116) target = $region28
      $region27: #{tpu_custom_call.1} parent=5 // pred_region
        %s120 = ssub.s32 %s11, 1
        %p121 = scmp.lt.s32.totalorder %s16, 1
        %s122 = scalar_select %p121, %s16, 1
        %s123 = smul.addr %s122, 54
        %s124 = smul.addr %s123, 4
        %s125 = scalar_lea.vmem %s0, %s124
        %p126 = pneg %p37
        %p127 = pneg %p34
        %p128 = pneg %p58
        %p129 = pneg %p55
        %p130 = pneg %p84
        %p131 = pneg %p81
        %s132 = sand.u32 %s71, 1
        %s133 = scalar_lea.sflag [#allocation4], %s132
        %s134 = sand.u32 %s71, 1
        %s135 = smul.addr %s134, 2
        %s136 = scalar_lea.vmem [#allocation3], %s135
        %p137 = scmp.lt.s32.totalorder %s16, 1
        %s138 = scalar_select %p137, %s16, 1
        %s139 = smul.addr %s138, 54
        %s140 = smul.addr %s139, 4
        %s141 = scalar_lea.vmem %s0, %s140
        %v143 = vld [vmem:[%s141] sm:$0xf]
        %v144 = vld [vmem:[%s141 + $0x4] sm:$0xf]
        %v145 = vld [vmem:[%s141 + $0xc] sm:$0xf]
        %v146 = vld [vmem:[%s141 + $0x10] sm:$0xf]
        %v147 = vld [vmem:[%s141 + $0x18] sm:$0xf]
        %v148 = vld [vmem:[%s141 + $0x1c] sm:$0xf]
        %v149 = vld [vmem:[%s141 + $0x24] sm:$0xf]
        %v150 = vld [vmem:[%s141 + $0x28] sm:$0xf]
        %v151 = vld [vmem:[%s141 + $0x30] sm:$0xf]
        %v152 = vld [vmem:[%s141 + $0x34] sm:$0xf]
        %v153 = vld [vmem:[%s141 + $0x3c] sm:$0xf]
        %v154 = vld [vmem:[%s141 + $0x40] sm:$0xf]
        %v155 = vld [vmem:[%s141 + $0x48] sm:$0xf]
        %v156 = vld [vmem:[%s141 + $0x4c] sm:$0xf]
        %v157 = vld [vmem:[%s141 + $0x54] sm:$0xf]
        %v158 = vld [vmem:[%s141 + $0x58] sm:$0xf]
        %v159 = vld [vmem:[%s141 + $0x60] sm:$0xf]
        %v160 = vld [vmem:[%s141 + $0x64] sm:$0xf]
        %v161 = vld [vmem:[%s141 + $0x6c] sm:$0xf]
        %v162 = vld [vmem:[%s141 + $0x70] sm:$0xf]
        %v163 = vld [vmem:[%s141 + $0x78] sm:$0xf]
        %v164 = vld [vmem:[%s141 + $0x7c] sm:$0xf]
        %v165 = vld [vmem:[%s141 + $0x84] sm:$0xf]
        %v166 = vld [vmem:[%s141 + $0x88] sm:$0xf]
        %v167 = vld [vmem:[%s141 + $0x90] sm:$0xf]
        %v168 = vld [vmem:[%s141 + $0x94] sm:$0xf]
        %v169 = vld [vmem:[%s141 + $0x9c] sm:$0xf]
        %v170 = vld [vmem:[%s141 + $0xa0] sm:$0xf]
        %v171 = vld [vmem:[%s141 + $0xa8] sm:$0xf]
        %v172 = vld [vmem:[%s141 + $0xac] sm:$0xf]
        %v173 = vld [vmem:[%s141 + $0xb4] sm:$0xf]
        %v174 = vld [vmem:[%s141 + $0xb8] sm:$0xf]
        %v207 = vunpack.c.l.b16 %v143
        %v208 = vunpack.c.l.b16 %v144
        %v209 = vunpack.c.l.b16 %v145
        %v210 = vunpack.c.l.b16 %v146
        %v211 = vunpack.c.l.b16 %v147
        %v212 = vunpack.c.l.b16 %v148
        %v213 = vunpack.c.l.b16 %v149
        %v214 = vunpack.c.l.b16 %v150
        %v215 = vunpack.c.l.b16 %v151
        %v216 = vunpack.c.l.b16 %v152
        %v217 = vunpack.c.l.b16 %v153
        %v218 = vunpack.c.l.b16 %v154
        %v219 = vunpack.c.l.b16 %v155
        %v220 = vunpack.c.l.b16 %v156
        %v221 = vunpack.c.l.b16 %v157
        %v222 = vunpack.c.l.b16 %v158
        %v223 = vunpack.c.l.b16 %v159
        %v224 = vunpack.c.l.b16 %v160
        %v225 = vunpack.c.l.b16 %v161
        %v226 = vunpack.c.l.b16 %v162
        %v227 = vunpack.c.l.b16 %v163
        %v228 = vunpack.c.l.b16 %v164
        %v229 = vunpack.c.l.b16 %v165
        %v230 = vunpack.c.l.b16 %v166
        %v231 = vunpack.c.l.b16 %v167
        %v232 = vunpack.c.l.b16 %v168
        %v233 = vunpack.c.l.b16 %v169
        %v234 = vunpack.c.l.b16 %v170
        %v235 = vunpack.c.l.b16 %v171
        %v236 = vunpack.c.l.b16 %v172
        %v237 = vunpack.c.l.b16 %v173
        %v238 = vunpack.c.l.b16 %v174
        %v239 = vpack.c.b16 %v208, %v207
        %v240 = vpack.c.b16 %v210, %v209
        %v241 = vpack.c.b16 %v212, %v211
        %v242 = vpack.c.b16 %v214, %v213
        %v243 = vpack.c.b16 %v216, %v215
        %v244 = vpack.c.b16 %v218, %v217
        %v245 = vpack.c.b16 %v220, %v219
        %v246 = vpack.c.b16 %v222, %v221
        %v247 = vpack.c.b16 %v224, %v223
        %v248 = vpack.c.b16 %v226, %v225
        %v249 = vpack.c.b16 %v228, %v227
        %v250 = vpack.c.b16 %v230, %v229
        %v251 = vpack.c.b16 %v232, %v231
        %v252 = vpack.c.b16 %v234, %v233
        %v253 = vpack.c.b16 %v236, %v235
        %v254 = vpack.c.b16 %v238, %v237
        %vm271 = vcmask 31744
        %272 = vst.msk [vmem:[#allocation2] sm:$0xff] %vm271, %v239
        %273 = vst.msk [vmem:[#allocation2 + $0x8] sm:$0xff] %vm271, %v240
        %274 = vst.msk [vmem:[#allocation2 + $0x10] sm:$0xff] %vm271, %v241
        %275 = vst.msk [vmem:[#allocation2 + $0x18] sm:$0xff] %vm271, %v242
        %276 = vst.msk [vmem:[#allocation2 + $0x20] sm:$0xff] %vm271, %v243
        %277 = vst.msk [vmem:[#allocation2 + $0x28] sm:$0xff] %vm271, %v244
        %278 = vst.msk [vmem:[#allocation2 + $0x30] sm:$0xff] %vm271, %v245
        %279 = vst.msk [vmem:[#allocation2 + $0x38] sm:$0xff] %vm271, %v246
        %280 = vst.msk [vmem:[#allocation2 + $0x40] sm:$0xff] %vm271, %v247
        %281 = vst.msk [vmem:[#allocation2 + $0x48] sm:$0xff] %vm271, %v248
        %282 = vst.msk [vmem:[#allocation2 + $0x50] sm:$0xff] %vm271, %v249
        %283 = vst.msk [vmem:[#allocation2 + $0x58] sm:$0xff] %vm271, %v250
        %284 = vst.msk [vmem:[#allocation2 + $0x60] sm:$0xff] %vm271, %v251
        %285 = vst.msk [vmem:[#allocation2 + $0x68] sm:$0xff] %vm271, %v252
        %286 = vst.msk [vmem:[#allocation2 + $0x70] sm:$0xff] %vm271, %v253
        %287 = vst.msk [vmem:[#allocation2 + $0x78] sm:$0xff] %vm271, %v254
        %v288 = vld [vmem:[%s141] sm:$0xf]
        %v289 = vld [vmem:[%s141 + $0x4] sm:$0xf]
        %v290 = vld [vmem:[%s141 + $0x8] sm:$0x1]
        %v291 = vld [vmem:[%s141 + $0xc] sm:$0xf]
        %v292 = vld [vmem:[%s141 + $0x10] sm:$0xf]
        %v293 = vld [vmem:[%s141 + $0x14] sm:$0x1]
        %v294 = vld [vmem:[%s141 + $0x18] sm:$0xf]
        %v295 = vld [vmem:[%s141 + $0x1c] sm:$0xf]
        %v296 = vld [vmem:[%s141 + $0x20] sm:$0x1]
        %v297 = vld [vmem:[%s141 + $0x24] sm:$0xf]
        %v298 = vld [vmem:[%s141 + $0x28] sm:$0xf]
        %v299 = vld [vmem:[%s141 + $0x2c] sm:$0x1]
        %v300 = vld [vmem:[%s141 + $0x30] sm:$0xf]
        %v301 = vld [vmem:[%s141 + $0x34] sm:$0xf]
        %v302 = vld [vmem:[%s141 + $0x38] sm:$0x1]
        %v303 = vld [vmem:[%s141 + $0x3c] sm:$0xf]
        %v304 = vld [vmem:[%s141 + $0x40] sm:$0xf]
        %v305 = vld [vmem:[%s141 + $0x44] sm:$0x1]
        %v306 = vld [vmem:[%s141 + $0x48] sm:$0xf]
        %v307 = vld [vmem:[%s141 + $0x4c] sm:$0xf]
        %v308 = vld [vmem:[%s141 + $0x50] sm:$0x1]
        %v309 = vld [vmem:[%s141 + $0x54] sm:$0xf]
        %v310 = vld [vmem:[%s141 + $0x58] sm:$0xf]
        %v311 = vld [vmem:[%s141 + $0x5c] sm:$0x1]
        %v312 = vld [vmem:[%s141 + $0x60] sm:$0xf]
        %v313 = vld [vmem:[%s141 + $0x64] sm:$0xf]
        %v314 = vld [vmem:[%s141 + $0x68] sm:$0x1]
        %v315 = vld [vmem:[%s141 + $0x6c] sm:$0xf]
        %v316 = vld [vmem:[%s141 + $0x70] sm:$0xf]
        %v317 = vld [vmem:[%s141 + $0x74] sm:$0x1]
        %v318 = vld [vmem:[%s141 + $0x78] sm:$0xf]
        %v319 = vld [vmem:[%s141 + $0x7c] sm:$0xf]
        %v320 = vld [vmem:[%s141 + $0x80] sm:$0x1]
        %v321 = vld [vmem:[%s141 + $0x84] sm:$0xf]
        %v322 = vld [vmem:[%s141 + $0x88] sm:$0xf]
        %v323 = vld [vmem:[%s141 + $0x8c] sm:$0x1]
        %v324 = vld [vmem:[%s141 + $0x90] sm:$0xf]
        %v325 = vld [vmem:[%s141 + $0x94] sm:$0xf]
        %v326 = vld [vmem:[%s141 + $0x98] sm:$0x1]
        %v327 = vld [vmem:[%s141 + $0x9c] sm:$0xf]
        %v328 = vld [vmem:[%s141 + $0xa0] sm:$0xf]
        %v329 = vld [vmem:[%s141 + $0xa4] sm:$0x1]
        %v330 = vld [vmem:[%s141 + $0xa8] sm:$0xf]
        %v331 = vld [vmem:[%s141 + $0xac] sm:$0xf]
        %v332 = vld [vmem:[%s141 + $0xb0] sm:$0x1]
        %v333 = vld [vmem:[%s141 + $0xb4] sm:$0xf]
        %v334 = vld [vmem:[%s141 + $0xb8] sm:$0xf]
        %v335 = vld [vmem:[%s141 + $0xbc] sm:$0x1]
        %v384 = vunpack.c.l.b16 %v288
        %v385 = vunpack.c.l.b16 %v289
        %v386 = vunpack.c.l.b16 %v290
        %v387 = vunpack.c.l.b16 %v291
        %v388 = vunpack.c.l.b16 %v292
        %v389 = vunpack.c.l.b16 %v293
        %v390 = vunpack.c.l.b16 %v294
        %v391 = vunpack.c.l.b16 %v295
        %v392 = vunpack.c.l.b16 %v296
        %v393 = vunpack.c.l.b16 %v297
        %v394 = vunpack.c.l.b16 %v298
        %v395 = vunpack.c.l.b16 %v299
        %v396 = vunpack.c.l.b16 %v300
        %v397 = vunpack.c.l.b16 %v301
        %v398 = vunpack.c.l.b16 %v302
        %v399 = vunpack.c.l.b16 %v303
        %v400 = vunpack.c.l.b16 %v304
        %v401 = vunpack.c.l.b16 %v305
        %v402 = vunpack.c.l.b16 %v306
        %v403 = vunpack.c.l.b16 %v307
        %v404 = vunpack.c.l.b16 %v308
        %v405 = vunpack.c.l.b16 %v309
        %v406 = vunpack.c.l.b16 %v310
        %v407 = vunpack.c.l.b16 %v311
        %v408 = vunpack.c.l.b16 %v312
        %v409 = vunpack.c.l.b16 %v313
        %v410 = vunpack.c.l.b16 %v314
        %v411 = vunpack.c.l.b16 %v315
        %v412 = vunpack.c.l.b16 %v316
        %v413 = vunpack.c.l.b16 %v317
        %v414 = vunpack.c.l.b16 %v318
        %v415 = vunpack.c.l.b16 %v319
        %v416 = vunpack.c.l.b16 %v320
        %v417 = vunpack.c.l.b16 %v321
        %v418 = vunpack.c.l.b16 %v322
        %v419 = vunpack.c.l.b16 %v323
        %v420 = vunpack.c.l.b16 %v324
        %v421 = vunpack.c.l.b16 %v325
        %v422 = vunpack.c.l.b16 %v326
        %v423 = vunpack.c.l.b16 %v327
        %v424 = vunpack.c.l.b16 %v328
        %v425 = vunpack.c.l.b16 %v329
        %v426 = vunpack.c.l.b16 %v330
        %v427 = vunpack.c.l.b16 %v331
        %v428 = vunpack.c.l.b16 %v332
        %v429 = vunpack.c.l.b16 %v333
        %v430 = vunpack.c.l.b16 %v334
        %v431 = vunpack.c.l.b16 %v335
        %v432 = vpack.c.b16 %v385, %v384
        %v433 = vpack.c.b16 %v386, %v386
        %v434 = vpack.c.b16 %v388, %v387
        %v435 = vpack.c.b16 %v389, %v389
        %v436 = vpack.c.b16 %v391, %v390
        %v437 = vpack.c.b16 %v392, %v392
        %v438 = vpack.c.b16 %v394, %v393
        %v439 = vpack.c.b16 %v395, %v395
        %v440 = vpack.c.b16 %v397, %v396
        %v441 = vpack.c.b16 %v398, %v398
        %v442 = vpack.c.b16 %v400, %v399
        %v443 = vpack.c.b16 %v401, %v401
        %v444 = vpack.c.b16 %v403, %v402
        %v445 = vpack.c.b16 %v404, %v404
        %v446 = vpack.c.b16 %v406, %v405
        %v447 = vpack.c.b16 %v407, %v407
        %v448 = vpack.c.b16 %v409, %v408
        %v449 = vpack.c.b16 %v410, %v410
        %v450 = vpack.c.b16 %v412, %v411
        %v451 = vpack.c.b16 %v413, %v413
        %v452 = vpack.c.b16 %v415, %v414
        %v453 = vpack.c.b16 %v416, %v416
        %v454 = vpack.c.b16 %v418, %v417
        %v455 = vpack.c.b16 %v419, %v419
        %v456 = vpack.c.b16 %v421, %v420
        %v457 = vpack.c.b16 %v422, %v422
        %v458 = vpack.c.b16 %v424, %v423
        %v459 = vpack.c.b16 %v425, %v425
        %v460 = vpack.c.b16 %v427, %v426
        %v461 = vpack.c.b16 %v428, %v428
        %v462 = vpack.c.b16 %v430, %v429
        %v463 = vpack.c.b16 %v431, %v431
        %vm464 = vsmask.f32 7424
        %v466 = vshrl.u32 %v432, 16
        %v468 = vshll.u32 %v432, 16
        %v470 = vrot.slane %v468, 1
        %v471 = vor.u32 %v466, %v470
        %v473 = vshll.u32 %v433, 16
        %v475 = vrot.slane %v473, 1
        %v476 = vsel %vm464, %v471, %v475
        %v478 = vshrl.u32 %v434, 16
        %v480 = vshll.u32 %v434, 16
        %v482 = vrot.slane %v480, 1
        %v483 = vor.u32 %v478, %v482
        %v485 = vshll.u32 %v435, 16
        %v487 = vrot.slane %v485, 1
        %v488 = vsel %vm464, %v483, %v487
        %v490 = vshrl.u32 %v436, 16
        %v492 = vshll.u32 %v436, 16
        %v494 = vrot.slane %v492, 1
        %v495 = vor.u32 %v490, %v494
        %v497 = vshll.u32 %v437, 16
        %v499 = vrot.slane %v497, 1
        %v500 = vsel %vm464, %v495, %v499
        %v502 = vshrl.u32 %v438, 16
        %v504 = vshll.u32 %v438, 16
        %v506 = vrot.slane %v504, 1
        %v507 = vor.u32 %v502, %v506
        %v509 = vshll.u32 %v439, 16
        %v511 = vrot.slane %v509, 1
        %v512 = vsel %vm464, %v507, %v511
        %v514 = vshrl.u32 %v440, 16
        %v516 = vshll.u32 %v440, 16
        %v518 = vrot.slane %v516, 1
        %v519 = vor.u32 %v514, %v518
        %v521 = vshll.u32 %v441, 16
        %v523 = vrot.slane %v521, 1
        %v524 = vsel %vm464, %v519, %v523
        %v526 = vshrl.u32 %v442, 16
        %v528 = vshll.u32 %v442, 16
        %v530 = vrot.slane %v528, 1
        %v531 = vor.u32 %v526, %v530
        %v533 = vshll.u32 %v443, 16
        %v535 = vrot.slane %v533, 1
        %v536 = vsel %vm464, %v531, %v535
        %v538 = vshrl.u32 %v444, 16
        %v540 = vshll.u32 %v444, 16
        %v542 = vrot.slane %v540, 1
        %v543 = vor.u32 %v538, %v542
        %v545 = vshll.u32 %v445, 16
        %v547 = vrot.slane %v545, 1
        %v548 = vsel %vm464, %v543, %v547
        %v550 = vshrl.u32 %v446, 16
        %v552 = vshll.u32 %v446, 16
        %v554 = vrot.slane %v552, 1
        %v555 = vor.u32 %v550, %v554
        %v557 = vshll.u32 %v447, 16
        %v559 = vrot.slane %v557, 1
        %v560 = vsel %vm464, %v555, %v559
        %v562 = vshrl.u32 %v448, 16
        %v564 = vshll.u32 %v448, 16
        %v566 = vrot.slane %v564, 1
        %v567 = vor.u32 %v562, %v566
        %v569 = vshll.u32 %v449, 16
        %v571 = vrot.slane %v569, 1
        %v572 = vsel %vm464, %v567, %v571
        %v574 = vshrl.u32 %v450, 16
        %v576 = vshll.u32 %v450, 16
        %v578 = vrot.slane %v576, 1
        %v579 = vor.u32 %v574, %v578
        %v581 = vshll.u32 %v451, 16
        %v583 = vrot.slane %v581, 1
        %v584 = vsel %vm464, %v579, %v583
        %v586 = vshrl.u32 %v452, 16
        %v588 = vshll.u32 %v452, 16
        %v590 = vrot.slane %v588, 1
        %v591 = vor.u32 %v586, %v590
        %v593 = vshll.u32 %v453, 16
        %v595 = vrot.slane %v593, 1
        %v596 = vsel %vm464, %v591, %v595
        %v598 = vshrl.u32 %v454, 16
        %v600 = vshll.u32 %v454, 16
        %v602 = vrot.slane %v600, 1
        %v603 = vor.u32 %v598, %v602
        %v605 = vshll.u32 %v455, 16
        %v607 = vrot.slane %v605, 1
        %v608 = vsel %vm464, %v603, %v607
        %v610 = vshrl.u32 %v456, 16
        %v612 = vshll.u32 %v456, 16
        %v614 = vrot.slane %v612, 1
        %v615 = vor.u32 %v610, %v614
        %v617 = vshll.u32 %v457, 16
        %v619 = vrot.slane %v617, 1
        %v620 = vsel %vm464, %v615, %v619
        %v622 = vshrl.u32 %v458, 16
        %v624 = vshll.u32 %v458, 16
        %v626 = vrot.slane %v624, 1
        %v627 = vor.u32 %v622, %v626
        %v629 = vshll.u32 %v459, 16
        %v631 = vrot.slane %v629, 1
        %v632 = vsel %vm464, %v627, %v631
        %v634 = vshrl.u32 %v460, 16
        %v636 = vshll.u32 %v460, 16
        %v638 = vrot.slane %v636, 1
        %v639 = vor.u32 %v634, %v638
        %v641 = vshll.u32 %v461, 16
        %v643 = vrot.slane %v641, 1
        %v644 = vsel %vm464, %v639, %v643
        %v646 = vshrl.u32 %v462, 16
        %v648 = vshll.u32 %v462, 16
        %v650 = vrot.slane %v648, 1
        %v651 = vor.u32 %v646, %v650
        %v653 = vshll.u32 %v463, 16
        %v655 = vrot.slane %v653, 1
        %v656 = vsel %vm464, %v651, %v655
        %657 = vrot.lane.b32.xlu0 %v476, 4
        %v658 = vpop.permute.xlu0 %657
        %659 = vrot.lane.b32.xlu0 %v488, 4
        %v660 = vpop.permute.xlu0 %659
        %661 = vrot.lane.b32.xlu0 %v500, 4
        %v662 = vpop.permute.xlu0 %661
        %663 = vrot.lane.b32.xlu0 %v512, 4
        %v664 = vpop.permute.xlu0 %663
        %665 = vrot.lane.b32.xlu0 %v524, 4
        %v666 = vpop.permute.xlu0 %665
        %667 = vrot.lane.b32.xlu0 %v536, 4
        %v668 = vpop.permute.xlu0 %667
        %669 = vrot.lane.b32.xlu0 %v548, 4
        %v670 = vpop.permute.xlu0 %669
        %671 = vrot.lane.b32.xlu0 %v560, 4
        %v672 = vpop.permute.xlu0 %671
        %673 = vrot.lane.b32.xlu0 %v572, 4
        %v674 = vpop.permute.xlu0 %673
        %675 = vrot.lane.b32.xlu0 %v584, 4
        %v676 = vpop.permute.xlu0 %675
        %677 = vrot.lane.b32.xlu0 %v596, 4
        %v678 = vpop.permute.xlu0 %677
        %679 = vrot.lane.b32.xlu0 %v608, 4
        %v680 = vpop.permute.xlu0 %679
        %681 = vrot.lane.b32.xlu0 %v620, 4
        %v682 = vpop.permute.xlu0 %681
        %683 = vrot.lane.b32.xlu0 %v632, 4
        %v684 = vpop.permute.xlu0 %683
        %685 = vrot.lane.b32.xlu0 %v644, 4
        %v686 = vpop.permute.xlu0 %685
        %687 = vrot.lane.b32.xlu0 %v656, 4
        %v688 = vpop.permute.xlu0 %687
        %vm705 = vcmask 64544
        %706 = vst.msk [vmem:[#allocation2] sm:$0xff] %vm705, %v658
        %707 = vst.msk [vmem:[#allocation2 + $0x8] sm:$0xff] %vm705, %v660
        %708 = vst.msk [vmem:[#allocation2 + $0x10] sm:$0xff] %vm705, %v662
        %709 = vst.msk [vmem:[#allocation2 + $0x18] sm:$0xff] %vm705, %v664
        %710 = vst.msk [vmem:[#allocation2 + $0x20] sm:$0xff] %vm705, %v666
        %711 = vst.msk [vmem:[#allocation2 + $0x28] sm:$0xff] %vm705, %v668
        %712 = vst.msk [vmem:[#allocation2 + $0x30] sm:$0xff] %vm705, %v670
        %713 = vst.msk [vmem:[#allocation2 + $0x38] sm:$0xff] %vm705, %v672
        %714 = vst.msk [vmem:[#allocation2 + $0x40] sm:$0xff] %vm705, %v674
        %715 = vst.msk [vmem:[#allocation2 + $0x48] sm:$0xff] %vm705, %v676
        %716 = vst.msk [vmem:[#allocation2 + $0x50] sm:$0xff] %vm705, %v678
        %717 = vst.msk [vmem:[#allocation2 + $0x58] sm:$0xff] %vm705, %v680
        %718 = vst.msk [vmem:[#allocation2 + $0x60] sm:$0xff] %vm705, %v682
        %719 = vst.msk [vmem:[#allocation2 + $0x68] sm:$0xff] %vm705, %v684
        %720 = vst.msk [vmem:[#allocation2 + $0x70] sm:$0xff] %vm705, %v686
        %721 = vst.msk [vmem:[#allocation2 + $0x78] sm:$0xff] %vm705, %v688
        %v722 = vld [vmem:[%s141] sm:$0xe]
        %v723 = vld [vmem:[%s141 + $0x4] sm:$0xf]
        %v724 = vld [vmem:[%s141 + $0x8] sm:$0x1]
        %v725 = vld [vmem:[%s141 + $0xc] sm:$0xe]
        %v726 = vld [vmem:[%s141 + $0x10] sm:$0xf]
        %v727 = vld [vmem:[%s141 + $0x14] sm:$0x1]
        %v728 = vld [vmem:[%s141 + $0x18] sm:$0xe]
        %v729 = vld [vmem:[%s141 + $0x1c] sm:$0xf]
        %v730 = vld [vmem:[%s141 + $0x20] sm:$0x1]
        %v731 = vld [vmem:[%s141 + $0x24] sm:$0xe]
        %v732 = vld [vmem:[%s141 + $0x28] sm:$0xf]
        %v733 = vld [vmem:[%s141 + $0x2c] sm:$0x1]
        %v734 = vld [vmem:[%s141 + $0x30] sm:$0xe]
        %v735 = vld [vmem:[%s141 + $0x34] sm:$0xf]
        %v736 = vld [vmem:[%s141 + $0x38] sm:$0x1]
        %v737 = vld [vmem:[%s141 + $0x3c] sm:$0xe]
        %v738 = vld [vmem:[%s141 + $0x40] sm:$0xf]
        %v739 = vld [vmem:[%s141 + $0x44] sm:$0x1]
        %v740 = vld [vmem:[%s141 + $0x48] sm:$0xe]
        %v741 = vld [vmem:[%s141 + $0x4c] sm:$0xf]
        %v742 = vld [vmem:[%s141 + $0x50] sm:$0x1]
        %v743 = vld [vmem:[%s141 + $0x54] sm:$0xe]
        %v744 = vld [vmem:[%s141 + $0x58] sm:$0xf]
        %v745 = vld [vmem:[%s141 + $0x5c] sm:$0x1]
        %v746 = vld [vmem:[%s141 + $0x60] sm:$0xe]
        %v747 = vld [vmem:[%s141 + $0x64] sm:$0xf]
        %v748 = vld [vmem:[%s141 + $0x68] sm:$0x1]
        %v749 = vld [vmem:[%s141 + $0x6c] sm:$0xe]
        %v750 = vld [vmem:[%s141 + $0x70] sm:$0xf]
        %v751 = vld [vmem:[%s141 + $0x74] sm:$0x1]
        %v752 = vld [vmem:[%s141 + $0x78] sm:$0xe]
        %v753 = vld [vmem:[%s141 + $0x7c] sm:$0xf]
        %v754 = vld [vmem:[%s141 + $0x80] sm:$0x1]
        %v755 = vld [vmem:[%s141 + $0x84] sm:$0xe]
        %v756 = vld [vmem:[%s141 + $0x88] sm:$0xf]
        %v757 = vld [vmem:[%s141 + $0x8c] sm:$0x1]
        %v758 = vld [vmem:[%s141 + $0x90] sm:$0xe]
        %v759 = vld [vmem:[%s141 + $0x94] sm:$0xf]
        %v760 = vld [vmem:[%s141 + $0x98] sm:$0x1]
        %v761 = vld [vmem:[%s141 + $0x9c] sm:$0xe]
        %v762 = vld [vmem:[%s141 + $0xa0] sm:$0xf]
        %v763 = vld [vmem:[%s141 + $0xa4] sm:$0x1]
        %v764 = vld [vmem:[%s141 + $0xa8] sm:$0xe]
        %v765 = vld [vmem:[%s141 + $0xac] sm:$0xf]
        %v766 = vld [vmem:[%s141 + $0xb0] sm:$0x1]
        %v767 = vld [vmem:[%s141 + $0xb4] sm:$0xe]
        %v768 = vld [vmem:[%s141 + $0xb8] sm:$0xf]
        %v769 = vld [vmem:[%s141 + $0xbc] sm:$0x1]
        %v818 = vunpack.c.l.b16 %v722
        %v819 = vunpack.c.l.b16 %v723
        %v820 = vunpack.c.l.b16 %v724
        %v821 = vunpack.c.l.b16 %v725
        %v822 = vunpack.c.l.b16 %v726
        %v823 = vunpack.c.l.b16 %v727
        %v824 = vunpack.c.l.b16 %v728
        %v825 = vunpack.c.l.b16 %v729
        %v826 = vunpack.c.l.b16 %v730
        %v827 = vunpack.c.l.b16 %v731
        %v828 = vunpack.c.l.b16 %v732
        %v829 = vunpack.c.l.b16 %v733
        %v830 = vunpack.c.l.b16 %v734
        %v831 = vunpack.c.l.b16 %v735
        %v832 = vunpack.c.l.b16 %v736
        %v833 = vunpack.c.l.b16 %v737
        %v834 = vunpack.c.l.b16 %v738
        %v835 = vunpack.c.l.b16 %v739
        %v836 = vunpack.c.l.b16 %v740
        %v837 = vunpack.c.l.b16 %v741
        %v838 = vunpack.c.l.b16 %v742
        %v839 = vunpack.c.l.b16 %v743
        %v840 = vunpack.c.l.b16 %v744
        %v841 = vunpack.c.l.b16 %v745
        %v842 = vunpack.c.l.b16 %v746
        %v843 = vunpack.c.l.b16 %v747
        %v844 = vunpack.c.l.b16 %v748
        %v845 = vunpack.c.l.b16 %v749
        %v846 = vunpack.c.l.b16 %v750
        %v847 = vunpack.c.l.b16 %v751
        %v848 = vunpack.c.l.b16 %v752
        %v849 = vunpack.c.l.b16 %v753
        %v850 = vunpack.c.l.b16 %v754
        %v851 = vunpack.c.l.b16 %v755
        %v852 = vunpack.c.l.b16 %v756
        %v853 = vunpack.c.l.b16 %v757
        %v854 = vunpack.c.l.b16 %v758
        %v855 = vunpack.c.l.b16 %v759
        %v856 = vunpack.c.l.b16 %v760
        %v857 = vunpack.c.l.b16 %v761
        %v858 = vunpack.c.l.b16 %v762
        %v859 = vunpack.c.l.b16 %v763
        %v860 = vunpack.c.l.b16 %v764
        %v861 = vunpack.c.l.b16 %v765
        %v862 = vunpack.c.l.b16 %v766
        %v863 = vunpack.c.l.b16 %v767
        %v864 = vunpack.c.l.b16 %v768
        %v865 = vunpack.c.l.b16 %v769
        %v866 = vpack.c.b16 %v819, %v818
        %v867 = vpack.c.b16 %v820, %v820
        %v868 = vpack.c.b16 %v822, %v821
        %v869 = vpack.c.b16 %v823, %v823
        %v870 = vpack.c.b16 %v825, %v824
        %v871 = vpack.c.b16 %v826, %v826
        %v872 = vpack.c.b16 %v828, %v827
        %v873 = vpack.c.b16 %v829, %v829
        %v874 = vpack.c.b16 %v831, %v830
        %v875 = vpack.c.b16 %v832, %v832
        %v876 = vpack.c.b16 %v834, %v833
        %v877 = vpack.c.b16 %v835, %v835
        %v878 = vpack.c.b16 %v837, %v836
        %v879 = vpack.c.b16 %v838, %v838
        %v880 = vpack.c.b16 %v840, %v839
        %v881 = vpack.c.b16 %v841, %v841
        %v882 = vpack.c.b16 %v843, %v842
        %v883 = vpack.c.b16 %v844, %v844
        %v884 = vpack.c.b16 %v846, %v845
        %v885 = vpack.c.b16 %v847, %v847
        %v886 = vpack.c.b16 %v849, %v848
        %v887 = vpack.c.b16 %v850, %v850
        %v888 = vpack.c.b16 %v852, %v851
        %v889 = vpack.c.b16 %v853, %v853
        %v890 = vpack.c.b16 %v855, %v854
        %v891 = vpack.c.b16 %v856, %v856
        %v892 = vpack.c.b16 %v858, %v857
        %v893 = vpack.c.b16 %v859, %v859
        %v894 = vpack.c.b16 %v861, %v860
        %v895 = vpack.c.b16 %v862, %v862
        %v896 = vpack.c.b16 %v864, %v863
        %v897 = vpack.c.b16 %v865, %v865
        %vm898 = vcmask 1046528
        %v899 = vrot.slane %v866, 1
        %v900 = vrot.slane %v867, 1
        %v901 = vsel %vm898, %v899, %v900
        %v902 = vrot.slane %v868, 1
        %v903 = vrot.slane %v869, 1
        %v904 = vsel %vm898, %v902, %v903
        %v905 = vrot.slane %v870, 1
        %v906 = vrot.slane %v871, 1
        %v907 = vsel %vm898, %v905, %v906
        %v908 = vrot.slane %v872, 1
        %v909 = vrot.slane %v873, 1
        %v910 = vsel %vm898, %v908, %v909
        %v911 = vrot.slane %v874, 1
        %v912 = vrot.slane %v875, 1
        %v913 = vsel %vm898, %v911, %v912
        %v914 = vrot.slane %v876, 1
        %v915 = vrot.slane %v877, 1
        %v916 = vsel %vm898, %v914, %v915
        %v917 = vrot.slane %v878, 1
        %v918 = vrot.slane %v879, 1
        %v919 = vsel %vm898, %v917, %v918
        %v920 = vrot.slane %v880, 1
        %v921 = vrot.slane %v881, 1
        %v922 = vsel %vm898, %v920, %v921
        %v923 = vrot.slane %v882, 1
        %v924 = vrot.slane %v883, 1
        %v925 = vsel %vm898, %v923, %v924
        %v926 = vrot.slane %v884, 1
        %v927 = vrot.slane %v885, 1
        %v928 = vsel %vm898, %v926, %v927
        %v929 = vrot.slane %v886, 1
        %v930 = vrot.slane %v887, 1
        %v931 = vsel %vm898, %v929, %v930
        %v932 = vrot.slane %v888, 1
        %v933 = vrot.slane %v889, 1
        %v934 = vsel %vm898, %v932, %v933
        %v935 = vrot.slane %v890, 1
        %v936 = vrot.slane %v891, 1
        %v937 = vsel %vm898, %v935, %v936
        %v938 = vrot.slane %v892, 1
        %v939 = vrot.slane %v893, 1
        %v940 = vsel %vm898, %v938, %v939
        %v941 = vrot.slane %v894, 1
        %v942 = vrot.slane %v895, 1
        %v943 = vsel %vm898, %v941, %v942
        %v944 = vrot.slane %v896, 1
        %v945 = vrot.slane %v897, 1
        %v946 = vsel %vm898, %v944, %v945
        %947 = vrot.lane.b32.xlu0 %v901, 8
        %v948 = vpop.permute.xlu0 %947
        %949 = vrot.lane.b32.xlu0 %v904, 8
        %v950 = vpop.permute.xlu0 %949
        %951 = vrot.lane.b32.xlu0 %v907, 8
        %v952 = vpop.permute.xlu0 %951
        %953 = vrot.lane.b32.xlu0 %v910, 8
        %v954 = vpop.permute.xlu0 %953
        %955 = vrot.lane.b32.xlu0 %v913, 8
        %v956 = vpop.permute.xlu0 %955
        %957 = vrot.lane.b32.xlu0 %v916, 8
        %v958 = vpop.permute.xlu0 %957
        %959 = vrot.lane.b32.xlu0 %v919, 8
        %v960 = vpop.permute.xlu0 %959
        %961 = vrot.lane.b32.xlu0 %v922, 8
        %v962 = vpop.permute.xlu0 %961
        %963 = vrot.lane.b32.xlu0 %v925, 8
        %v964 = vpop.permute.xlu0 %963
        %965 = vrot.lane.b32.xlu0 %v928, 8
        %v966 = vpop.permute.xlu0 %965
        %967 = vrot.lane.b32.xlu0 %v931, 8
        %v968 = vpop.permute.xlu0 %967
        %969 = vrot.lane.b32.xlu0 %v934, 8
        %v970 = vpop.permute.xlu0 %969
        %971 = vrot.lane.b32.xlu0 %v937, 8
        %v972 = vpop.permute.xlu0 %971
        %973 = vrot.lane.b32.xlu0 %v940, 8
        %v974 = vpop.permute.xlu0 %973
        %975 = vrot.lane.b32.xlu0 %v943, 8
        %v976 = vpop.permute.xlu0 %975
        %977 = vrot.lane.b32.xlu0 %v946, 8
        %v978 = vpop.permute.xlu0 %977
        %vm995 = vcmask 97344
        %996 = vst.msk [vmem:[#allocation2] sm:$0xff] %vm995, %v948
        %997 = vst.msk [vmem:[#allocation2 + $0x8] sm:$0xff] %vm995, %v950
        %998 = vst.msk [vmem:[#allocation2 + $0x10] sm:$0xff] %vm995, %v952
        %999 = vst.msk [vmem:[#allocation2 + $0x18] sm:$0xff] %vm995, %v954
        %1000 = vst.msk [vmem:[#allocation2 + $0x20] sm:$0xff] %vm995, %v956
        %1001 = vst.msk [vmem:[#allocation2 + $0x28] sm:$0xff] %vm995, %v958
        %1002 = vst.msk [vmem:[#allocation2 + $0x30] sm:$0xff] %vm995, %v960
        %1003 = vst.msk [vmem:[#allocation2 + $0x38] sm:$0xff] %vm995, %v962
        %1004 = vst.msk [vmem:[#allocation2 + $0x40] sm:$0xff] %vm995, %v964
        %1005 = vst.msk [vmem:[#allocation2 + $0x48] sm:$0xff] %vm995, %v966
        %1006 = vst.msk [vmem:[#allocation2 + $0x50] sm:$0xff] %vm995, %v968
        %1007 = vst.msk [vmem:[#allocation2 + $0x58] sm:$0xff] %vm995, %v970
        %1008 = vst.msk [vmem:[#allocation2 + $0x60] sm:$0xff] %vm995, %v972
        %1009 = vst.msk [vmem:[#allocation2 + $0x68] sm:$0xff] %vm995, %v974
        %1010 = vst.msk [vmem:[#allocation2 + $0x70] sm:$0xff] %vm995, %v976
        %1011 = vst.msk [vmem:[#allocation2 + $0x78] sm:$0xff] %vm995, %v978
        %s1012 = scalar_lea.vmem %s141, 12
        %v1013 = vld [vmem:[%s1012] sm:$0xf]
        %v1014 = vld [vmem:[%s1012 + $0x4] sm:$0xf]
        %v1015 = vld [vmem:[%s1012 + $0xc] sm:$0xf]
        %v1016 = vld [vmem:[%s1012 + $0x10] sm:$0xf]
        %v1017 = vld [vmem:[%s1012 + $0x18] sm:$0xf]
        %v1018 = vld [vmem:[%s1012 + $0x1c] sm:$0xf]
        %v1019 = vld [vmem:[%s1012 + $0x24] sm:$0xf]
        %v1020 = vld [vmem:[%s1012 + $0x28] sm:$0xf]
        %v1021 = vld [vmem:[%s1012 + $0x30] sm:$0xf]
        %v1022 = vld [vmem:[%s1012 + $0x34] sm:$0xf]
        %v1023 = vld [vmem:[%s1012 + $0x3c] sm:$0xf]
        %v1024 = vld [vmem:[%s1012 + $0x40] sm:$0xf]
        %v1025 = vld [vmem:[%s1012 + $0x48] sm:$0xf]
        %v1026 = vld [vmem:[%s1012 + $0x4c] sm:$0xf]
        %v1027 = vld [vmem:[%s1012 + $0x54] sm:$0xf]
        %v1028 = vld [vmem:[%s1012 + $0x58] sm:$0xf]
        %v1029 = vld [vmem:[%s1012 + $0x60] sm:$0xf]
        %v1030 = vld [vmem:[%s1012 + $0x64] sm:$0xf]
        %v1031 = vld [vmem:[%s1012 + $0x6c] sm:$0xf]
        %v1032 = vld [vmem:[%s1012 + $0x70] sm:$0xf]
        %v1033 = vld [vmem:[%s1012 + $0x78] sm:$0xf]
        %v1034 = vld [vmem:[%s1012 + $0x7c] sm:$0xf]
        %v1035 = vld [vmem:[%s1012 + $0x84] sm:$0xf]
        %v1036 = vld [vmem:[%s1012 + $0x88] sm:$0xf]
        %v1037 = vld [vmem:[%s1012 + $0x90] sm:$0xf]
        %v1038 = vld [vmem:[%s1012 + $0x94] sm:$0xf]
        %v1039 = vld [vmem:[%s1012 + $0x9c] sm:$0xf]
        %v1040 = vld [vmem:[%s1012 + $0xa0] sm:$0xf]
        %v1041 = vld [vmem:[%s1012 + $0xa8] sm:$0xf]
        %v1042 = vld [vmem:[%s1012 + $0xac] sm:$0xf]
        %v1043 = vld [vmem:[%s1012 + $0xb4] sm:$0xf]
        %v1044 = vld [vmem:[%s1012 + $0xb8] sm:$0xf]
        %v1077 = vunpack.c.l.b16 %v1013
        %v1078 = vunpack.c.l.b16 %v1014
        %v1079 = vunpack.c.l.b16 %v1015
        %v1080 = vunpack.c.l.b16 %v1016
        %v1081 = vunpack.c.l.b16 %v1017
        %v1082 = vunpack.c.l.b16 %v1018
        %v1083 = vunpack.c.l.b16 %v1019
        %v1084 = vunpack.c.l.b16 %v1020
        %v1085 = vunpack.c.l.b16 %v1021
        %v1086 = vunpack.c.l.b16 %v1022
        %v1087 = vunpack.c.l.b16 %v1023
        %v1088 = vunpack.c.l.b16 %v1024
        %v1089 = vunpack.c.l.b16 %v1025
        %v1090 = vunpack.c.l.b16 %v1026
        %v1091 = vunpack.c.l.b16 %v1027
        %v1092 = vunpack.c.l.b16 %v1028
        %v1093 = vunpack.c.l.b16 %v1029
        %v1094 = vunpack.c.l.b16 %v1030
        %v1095 = vunpack.c.l.b16 %v1031
        %v1096 = vunpack.c.l.b16 %v1032
        %v1097 = vunpack.c.l.b16 %v1033
        %v1098 = vunpack.c.l.b16 %v1034
        %v1099 = vunpack.c.l.b16 %v1035
        %v1100 = vunpack.c.l.b16 %v1036
        %v1101 = vunpack.c.l.b16 %v1037
        %v1102 = vunpack.c.l.b16 %v1038
        %v1103 = vunpack.c.l.b16 %v1039
        %v1104 = vunpack.c.l.b16 %v1040
        %v1105 = vunpack.c.l.b16 %v1041
        %v1106 = vunpack.c.l.b16 %v1042
        %v1107 = vunpack.c.l.b16 %v1043
        %v1108 = vunpack.c.l.b16 %v1044
        %v1109 = vpack.c.b16 %v1078, %v1077
        %v1110 = vpack.c.b16 %v1080, %v1079
        %v1111 = vpack.c.b16 %v1082, %v1081
        %v1112 = vpack.c.b16 %v1084, %v1083
        %v1113 = vpack.c.b16 %v1086, %v1085
        %v1114 = vpack.c.b16 %v1088, %v1087
        %v1115 = vpack.c.b16 %v1090, %v1089
        %v1116 = vpack.c.b16 %v1092, %v1091
        %v1117 = vpack.c.b16 %v1094, %v1093
        %v1118 = vpack.c.b16 %v1096, %v1095
        %v1119 = vpack.c.b16 %v1098, %v1097
        %v1120 = vpack.c.b16 %v1100, %v1099
        %v1121 = vpack.c.b16 %v1102, %v1101
        %v1122 = vpack.c.b16 %v1104, %v1103
        %v1123 = vpack.c.b16 %v1106, %v1105
        %v1124 = vpack.c.b16 %v1108, %v1107
        %1125 = vrot.lane.b32.xlu0 %v1109, 12
        %v1126 = vpop.permute.xlu0 %1125
        %1127 = vrot.lane.b32.xlu0 %v1110, 12
        %v1128 = vpop.permute.xlu0 %1127
        %1129 = vrot.lane.b32.xlu0 %v1111, 12
        %v1130 = vpop.permute.xlu0 %1129
        %1131 = vrot.lane.b32.xlu0 %v1112, 12
        %v1132 = vpop.permute.xlu0 %1131
        %1133 = vrot.lane.b32.xlu0 %v1113, 12
        %v1134 = vpop.permute.xlu0 %1133
        %1135 = vrot.lane.b32.xlu0 %v1114, 12
        %v1136 = vpop.permute.xlu0 %1135
        %1137 = vrot.lane.b32.xlu0 %v1115, 12
        %v1138 = vpop.permute.xlu0 %1137
        %1139 = vrot.lane.b32.xlu0 %v1116, 12
        %v1140 = vpop.permute.xlu0 %1139
        %1141 = vrot.lane.b32.xlu0 %v1117, 12
        %v1142 = vpop.permute.xlu0 %1141
        %1143 = vrot.lane.b32.xlu0 %v1118, 12
        %v1144 = vpop.permute.xlu0 %1143
        %1145 = vrot.lane.b32.xlu0 %v1119, 12
        %v1146 = vpop.permute.xlu0 %1145
        %1147 = vrot.lane.b32.xlu0 %v1120, 12
        %v1148 = vpop.permute.xlu0 %1147
        %1149 = vrot.lane.b32.xlu0 %v1121, 12
        %v1150 = vpop.permute.xlu0 %1149
        %1151 = vrot.lane.b32.xlu0 %v1122, 12
        %v1152 = vpop.permute.xlu0 %1151
        %1153 = vrot.lane.b32.xlu0 %v1123, 12
        %v1154 = vpop.permute.xlu0 %1153
        %1155 = vrot.lane.b32.xlu0 %v1124, 12
        %v1156 = vpop.permute.xlu0 %1155
        %vm1173 = vcmask 130144
        %1174 = vst.msk [vmem:[#allocation2] sm:$0xff] %vm1173, %v1126
        %1175 = vst.msk [vmem:[#allocation2 + $0x8] sm:$0xff] %vm1173, %v1128
        %1176 = vst.msk [vmem:[#allocation2 + $0x10] sm:$0xff] %vm1173, %v1130
        %1177 = vst.msk [vmem:[#allocation2 + $0x18] sm:$0xff] %vm1173, %v1132
        %1178 = vst.msk [vmem:[#allocation2 + $0x20] sm:$0xff] %vm1173, %v1134
        %1179 = vst.msk [vmem:[#allocation2 + $0x28] sm:$0xff] %vm1173, %v1136
        %1180 = vst.msk [vmem:[#allocation2 + $0x30] sm:$0xff] %vm1173, %v1138
        %1181 = vst.msk [vmem:[#allocation2 + $0x38] sm:$0xff] %vm1173, %v1140
        %1182 = vst.msk [vmem:[#allocation2 + $0x40] sm:$0xff] %vm1173, %v1142
        %1183 = vst.msk [vmem:[#allocation2 + $0x48] sm:$0xff] %vm1173, %v1144
        %1184 = vst.msk [vmem:[#allocation2 + $0x50] sm:$0xff] %vm1173, %v1146
        %1185 = vst.msk [vmem:[#allocation2 + $0x58] sm:$0xff] %vm1173, %v1148
        %1186 = vst.msk [vmem:[#allocation2 + $0x60] sm:$0xff] %vm1173, %v1150
        %1187 = vst.msk [vmem:[#allocation2 + $0x68] sm:$0xff] %vm1173, %v1152
        %1188 = vst.msk [vmem:[#allocation2 + $0x70] sm:$0xff] %vm1173, %v1154
        %1189 = vst.msk [vmem:[#allocation2 + $0x78] sm:$0xff] %vm1173, %v1156
        %v1190 = vld [vmem:[%s1012] sm:$0xf]
        %v1191 = vld [vmem:[%s1012 + $0x4] sm:$0xf]
        %v1192 = vld [vmem:[%s1012 + $0x8] sm:$0x1]
        %v1193 = vld [vmem:[%s1012 + $0xc] sm:$0xf]
        %v1194 = vld [vmem:[%s1012 + $0x10] sm:$0xf]
        %v1195 = vld [vmem:[%s1012 + $0x14] sm:$0x1]
        %v1196 = vld [vmem:[%s1012 + $0x18] sm:$0xf]
        %v1197 = vld [vmem:[%s1012 + $0x1c] sm:$0xf]
        %v1198 = vld [vmem:[%s1012 + $0x20] sm:$0x1]
        %v1199 = vld [vmem:[%s1012 + $0x24] sm:$0xf]
        %v1200 = vld [vmem:[%s1012 + $0x28] sm:$0xf]
        %v1201 = vld [vmem:[%s1012 + $0x2c] sm:$0x1]
        %v1202 = vld [vmem:[%s1012 + $0x30] sm:$0xf]
        %v1203 = vld [vmem:[%s1012 + $0x34] sm:$0xf]
        %v1204 = vld [vmem:[%s1012 + $0x38] sm:$0x1]
        %v1205 = vld [vmem:[%s1012 + $0x3c] sm:$0xf]
        %v1206 = vld [vmem:[%s1012 + $0x40] sm:$0xf]
        %v1207 = vld [vmem:[%s1012 + $0x44] sm:$0x1]
        %v1208 = vld [vmem:[%s1012 + $0x48] sm:$0xf]
        %v1209 = vld [vmem:[%s1012 + $0x4c] sm:$0xf]
        %v1210 = vld [vmem:[%s1012 + $0x50] sm:$0x1]
        %v1211 = vld [vmem:[%s1012 + $0x54] sm:$0xf]
        %v1212 = vld [vmem:[%s1012 + $0x58] sm:$0xf]
        %v1213 = vld [vmem:[%s1012 + $0x5c] sm:$0x1]
        %v1214 = vld [vmem:[%s1012 + $0x60] sm:$0xf]
        %v1215 = vld [vmem:[%s1012 + $0x64] sm:$0xf]
        %v1216 = vld [vmem:[%s1012 + $0x68] sm:$0x1]
        %v1217 = vld [vmem:[%s1012 + $0x6c] sm:$0xf]
        %v1218 = vld [vmem:[%s1012 + $0x70] sm:$0xf]
        %v1219 = vld [vmem:[%s1012 + $0x74] sm:$0x1]
        %v1220 = vld [vmem:[%s1012 + $0x78] sm:$0xf]
        %v1221 = vld [vmem:[%s1012 + $0x7c] sm:$0xf]
        %v1222 = vld [vmem:[%s1012 + $0x80] sm:$0x1]
        %v1223 = vld [vmem:[%s1012 + $0x84] sm:$0xf]
        %v1224 = vld [vmem:[%s1012 + $0x88] sm:$0xf]
        %v1225 = vld [vmem:[%s1012 + $0x8c] sm:$0x1]
        %v1226 = vld [vmem:[%s1012 + $0x90] sm:$0xf]
        %v1227 = vld [vmem:[%s1012 + $0x94] sm:$0xf]
        %v1228 = vld [vmem:[%s1012 + $0x98] sm:$0x1]
        %v1229 = vld [vmem:[%s1012 + $0x9c] sm:$0xf]
        %v1230 = vld [vmem:[%s1012 + $0xa0] sm:$0xf]
        %v1231 = vld [vmem:[%s1012 + $0xa4] sm:$0x1]
        %v1232 = vld [vmem:[%s1012 + $0xa8] sm:$0xf]
        %v1233 = vld [vmem:[%s1012 + $0xac] sm:$0xf]
        %v1234 = vld [vmem:[%s1012 + $0xb0] sm:$0x1]
        %v1235 = vld [vmem:[%s1012 + $0xb4] sm:$0xf]
        %v1236 = vld [vmem:[%s1012 + $0xb8] sm:$0xf]
        %v1237 = vld [vmem:[%s1012 + $0xbc] sm:$0x1]
        %v1286 = vunpack.c.l.b16 %v1190
        %v1287 = vunpack.c.l.b16 %v1191
        %v1288 = vunpack.c.l.b16 %v1192
        %v1289 = vunpack.c.l.b16 %v1193
        %v1290 = vunpack.c.l.b16 %v1194
        %v1291 = vunpack.c.l.b16 %v1195
        %v1292 = vunpack.c.l.b16 %v1196
        %v1293 = vunpack.c.l.b16 %v1197
        %v1294 = vunpack.c.l.b16 %v1198
        %v1295 = vunpack.c.l.b16 %v1199
        %v1296 = vunpack.c.l.b16 %v1200
        %v1297 = vunpack.c.l.b16 %v1201
        %v1298 = vunpack.c.l.b16 %v1202
        %v1299 = vunpack.c.l.b16 %v1203
        %v1300 = vunpack.c.l.b16 %v1204
        %v1301 = vunpack.c.l.b16 %v1205
        %v1302 = vunpack.c.l.b16 %v1206
        %v1303 = vunpack.c.l.b16 %v1207
        %v1304 = vunpack.c.l.b16 %v1208
        %v1305 = vunpack.c.l.b16 %v1209
        %v1306 = vunpack.c.l.b16 %v1210
        %v1307 = vunpack.c.l.b16 %v1211
        %v1308 = vunpack.c.l.b16 %v1212
        %v1309 = vunpack.c.l.b16 %v1213
        %v1310 = vunpack.c.l.b16 %v1214
        %v1311 = vunpack.c.l.b16 %v1215
        %v1312 = vunpack.c.l.b16 %v1216
        %v1313 = vunpack.c.l.b16 %v1217
        %v1314 = vunpack.c.l.b16 %v1218
        %v1315 = vunpack.c.l.b16 %v1219
        %v1316 = vunpack.c.l.b16 %v1220
        %v1317 = vunpack.c.l.b16 %v1221
        %v1318 = vunpack.c.l.b16 %v1222
        %v1319 = vunpack.c.l.b16 %v1223
        %v1320 = vunpack.c.l.b16 %v1224
        %v1321 = vunpack.c.l.b16 %v1225
        %v1322 = vunpack.c.l.b16 %v1226
        %v1323 = vunpack.c.l.b16 %v1227
        %v1324 = vunpack.c.l.b16 %v1228
        %v1325 = vunpack.c.l.b16 %v1229
        %v1326 = vunpack.c.l.b16 %v1230
        %v1327 = vunpack.c.l.b16 %v1231
        %v1328 = vunpack.c.l.b16 %v1232
        %v1329 = vunpack.c.l.b16 %v1233
        %v1330 = vunpack.c.l.b16 %v1234
        %v1331 = vunpack.c.l.b16 %v1235
        %v1332 = vunpack.c.l.b16 %v1236
        %v1333 = vunpack.c.l.b16 %v1237
        %v1334 = vpack.c.b16 %v1287, %v1286
        %v1335 = vpack.c.b16 %v1288, %v1288
        %v1336 = vpack.c.b16 %v1290, %v1289
        %v1337 = vpack.c.b16 %v1291, %v1291
        %v1338 = vpack.c.b16 %v1293, %v1292
        %v1339 = vpack.c.b16 %v1294, %v1294
        %v1340 = vpack.c.b16 %v1296, %v1295
        %v1341 = vpack.c.b16 %v1297, %v1297
        %v1342 = vpack.c.b16 %v1299, %v1298
        %v1343 = vpack.c.b16 %v1300, %v1300
        %v1344 = vpack.c.b16 %v1302, %v1301
        %v1345 = vpack.c.b16 %v1303, %v1303
        %v1346 = vpack.c.b16 %v1305, %v1304
        %v1347 = vpack.c.b16 %v1306, %v1306
        %v1348 = vpack.c.b16 %v1308, %v1307
        %v1349 = vpack.c.b16 %v1309, %v1309
        %v1350 = vpack.c.b16 %v1311, %v1310
        %v1351 = vpack.c.b16 %v1312, %v1312
        %v1352 = vpack.c.b16 %v1314, %v1313
        %v1353 = vpack.c.b16 %v1315, %v1315
        %v1354 = vpack.c.b16 %v1317, %v1316
        %v1355 = vpack.c.b16 %v1318, %v1318
        %v1356 = vpack.c.b16 %v1320, %v1319
        %v1357 = vpack.c.b16 %v1321, %v1321
        %v1358 = vpack.c.b16 %v1323, %v1322
        %v1359 = vpack.c.b16 %v1324, %v1324
        %v1360 = vpack.c.b16 %v1326, %v1325
        %v1361 = vpack.c.b16 %v1327, %v1327
        %v1362 = vpack.c.b16 %v1329, %v1328
        %v1363 = vpack.c.b16 %v1330, %v1330
        %v1364 = vpack.c.b16 %v1332, %v1331
        %v1365 = vpack.c.b16 %v1333, %v1333
        %v1367 = vshrl.u32 %v1334, 16
        %v1369 = vshll.u32 %v1334, 16
        %v1371 = vrot.slane %v1369, 1
        %v1372 = vor.u32 %v1367, %v1371
        %v1374 = vshll.u32 %v1335, 16
        %v1376 = vrot.slane %v1374, 1
        %v1377 = vsel %vm464, %v1372, %v1376
        %v1379 = vshrl.u32 %v1336, 16
        %v1381 = vshll.u32 %v1336, 16
        %v1383 = vrot.slane %v1381, 1
        %v1384 = vor.u32 %v1379, %v1383
        %v1386 = vshll.u32 %v1337, 16
        %v1388 = vrot.slane %v1386, 1
        %v1389 = vsel %vm464, %v1384, %v1388
        %v1391 = vshrl.u32 %v1338, 16
        %v1393 = vshll.u32 %v1338, 16
        %v1395 = vrot.slane %v1393, 1
        %v1396 = vor.u32 %v1391, %v1395
        %v1398 = vshll.u32 %v1339, 16
        %v1400 = vrot.slane %v1398, 1
        %v1401 = vsel %vm464, %v1396, %v1400
        %v1403 = vshrl.u32 %v1340, 16
        %v1405 = vshll.u32 %v1340, 16
        %v1407 = vrot.slane %v1405, 1
        %v1408 = vor.u32 %v1403, %v1407
        %v1410 = vshll.u32 %v1341, 16
        %v1412 = vrot.slane %v1410, 1
        %v1413 = vsel %vm464, %v1408, %v1412
        %v1415 = vshrl.u32 %v1342, 16
        %v1417 = vshll.u32 %v1342, 16
        %v1419 = vrot.slane %v1417, 1
        %v1420 = vor.u32 %v1415, %v1419
        %v1422 = vshll.u32 %v1343, 16
        %v1424 = vrot.slane %v1422, 1
        %v1425 = vsel %vm464, %v1420, %v1424
        %v1427 = vshrl.u32 %v1344, 16
        %v1429 = vshll.u32 %v1344, 16
        %v1431 = vrot.slane %v1429, 1
        %v1432 = vor.u32 %v1427, %v1431
        %v1434 = vshll.u32 %v1345, 16
        %v1436 = vrot.slane %v1434, 1
        %v1437 = vsel %vm464, %v1432, %v1436
        %v1439 = vshrl.u32 %v1346, 16
        %v1441 = vshll.u32 %v1346, 16
        %v1443 = vrot.slane %v1441, 1
        %v1444 = vor.u32 %v1439, %v1443
        %v1446 = vshll.u32 %v1347, 16
        %v1448 = vrot.slane %v1446, 1
        %v1449 = vsel %vm464, %v1444, %v1448
        %v1451 = vshrl.u32 %v1348, 16
        %v1453 = vshll.u32 %v1348, 16
        %v1455 = vrot.slane %v1453, 1
        %v1456 = vor.u32 %v1451, %v1455
        %v1458 = vshll.u32 %v1349, 16
        %v1460 = vrot.slane %v1458, 1
        %v1461 = vsel %vm464, %v1456, %v1460
        %v1463 = vshrl.u32 %v1350, 16
        %v1465 = vshll.u32 %v1350, 16
        %v1467 = vrot.slane %v1465, 1
        %v1468 = vor.u32 %v1463, %v1467
        %v1470 = vshll.u32 %v1351, 16
        %v1472 = vrot.slane %v1470, 1
        %v1473 = vsel %vm464, %v1468, %v1472
        %v1475 = vshrl.u32 %v1352, 16
        %v1477 = vshll.u32 %v1352, 16
        %v1479 = vrot.slane %v1477, 1
        %v1480 = vor.u32 %v1475, %v1479
        %v1482 = vshll.u32 %v1353, 16
        %v1484 = vrot.slane %v1482, 1
        %v1485 = vsel %vm464, %v1480, %v1484
        %v1487 = vshrl.u32 %v1354, 16
        %v1489 = vshll.u32 %v1354, 16
        %v1491 = vrot.slane %v1489, 1
        %v1492 = vor.u32 %v1487, %v1491
        %v1494 = vshll.u32 %v1355, 16
        %v1496 = vrot.slane %v1494, 1
        %v1497 = vsel %vm464, %v1492, %v1496
        %v1499 = vshrl.u32 %v1356, 16
        %v1501 = vshll.u32 %v1356, 16
        %v1503 = vrot.slane %v1501, 1
        %v1504 = vor.u32 %v1499, %v1503
        %v1506 = vshll.u32 %v1357, 16
        %v1508 = vrot.slane %v1506, 1
        %v1509 = vsel %vm464, %v1504, %v1508
        %v1511 = vshrl.u32 %v1358, 16
        %v1513 = vshll.u32 %v1358, 16
        %v1515 = vrot.slane %v1513, 1
        %v1516 = vor.u32 %v1511, %v1515
        %v1518 = vshll.u32 %v1359, 16
        %v1520 = vrot.slane %v1518, 1
        %v1521 = vsel %vm464, %v1516, %v1520
        %v1523 = vshrl.u32 %v1360, 16
        %v1525 = vshll.u32 %v1360, 16
        %v1527 = vrot.slane %v1525, 1
        %v1528 = vor.u32 %v1523, %v1527
        %v1530 = vshll.u32 %v1361, 16
        %v1532 = vrot.slane %v1530, 1
        %v1533 = vsel %vm464, %v1528, %v1532
        %v1535 = vshrl.u32 %v1362, 16
        %v1537 = vshll.u32 %v1362, 16
        %v1539 = vrot.slane %v1537, 1
        %v1540 = vor.u32 %v1535, %v1539
        %v1542 = vshll.u32 %v1363, 16
        %v1544 = vrot.slane %v1542, 1
        %v1545 = vsel %vm464, %v1540, %v1544
        %v1547 = vshrl.u32 %v1364, 16
        %v1549 = vshll.u32 %v1364, 16
        %v1551 = vrot.slane %v1549, 1
        %v1552 = vor.u32 %v1547, %v1551
        %v1554 = vshll.u32 %v1365, 16
        %v1556 = vrot.slane %v1554, 1
        %v1557 = vsel %vm464, %v1552, %v1556
        %1558 = vrot.lane.b32.xlu0 %v1377, 16
        %v1559 = vpop.permute.xlu0 %1558
        %1560 = vrot.lane.b32.xlu0 %v1389, 16
        %v1561 = vpop.permute.xlu0 %1560
        %1562 = vrot.lane.b32.xlu0 %v1401, 16
        %v1563 = vpop.permute.xlu0 %1562
        %1564 = vrot.lane.b32.xlu0 %v1413, 16
        %v1565 = vpop.permute.xlu0 %1564
        %1566 = vrot.lane.b32.xlu0 %v1425, 16
        %v1567 = vpop.permute.xlu0 %1566
        %1568 = vrot.lane.b32.xlu0 %v1437, 16
        %v1569 = vpop.permute.xlu0 %1568
        %1570 = vrot.lane.b32.xlu0 %v1449, 16
        %v1571 = vpop.permute.xlu0 %1570
        %1572 = vrot.lane.b32.xlu0 %v1461, 16
        %v1573 = vpop.permute.xlu0 %1572
        %1574 = vrot.lane.b32.xlu0 %v1473, 16
        %v1575 = vpop.permute.xlu0 %1574
        %1576 = vrot.lane.b32.xlu0 %v1485, 16
        %v1577 = vpop.permute.xlu0 %1576
        %1578 = vrot.lane.b32.xlu0 %v1497, 16
        %v1579 = vpop.permute.xlu0 %1578
        %1580 = vrot.lane.b32.xlu0 %v1509, 16
        %v1581 = vpop.permute.xlu0 %1580
        %1582 = vrot.lane.b32.xlu0 %v1521, 16
        %v1583 = vpop.permute.xlu0 %1582
        %1584 = vrot.lane.b32.xlu0 %v1533, 16
        %v1585 = vpop.permute.xlu0 %1584
        %1586 = vrot.lane.b32.xlu0 %v1545, 16
        %v1587 = vpop.permute.xlu0 %1586
        %1588 = vrot.lane.b32.xlu0 %v1557, 16
        %v1589 = vpop.permute.xlu0 %1588
        %vm1606 = vcmask 162944
        %1607 = vst.msk [vmem:[#allocation2] sm:$0xff] %vm1606, %v1559
        %1608 = vst.msk [vmem:[#allocation2 + $0x8] sm:$0xff] %vm1606, %v1561
        %1609 = vst.msk [vmem:[#allocation2 + $0x10] sm:$0xff] %vm1606, %v1563
        %1610 = vst.msk [vmem:[#allocation2 + $0x18] sm:$0xff] %vm1606, %v1565
        %1611 = vst.msk [vmem:[#allocation2 + $0x20] sm:$0xff] %vm1606, %v1567
        %1612 = vst.msk [vmem:[#allocation2 + $0x28] sm:$0xff] %vm1606, %v1569
        %1613 = vst.msk [vmem:[#allocation2 + $0x30] sm:$0xff] %vm1606, %v1571
        %1614 = vst.msk [vmem:[#allocation2 + $0x38] sm:$0xff] %vm1606, %v1573
        %1615 = vst.msk [vmem:[#allocation2 + $0x40] sm:$0xff] %vm1606, %v1575
        %1616 = vst.msk [vmem:[#allocation2 + $0x48] sm:$0xff] %vm1606, %v1577
        %1617 = vst.msk [vmem:[#allocation2 + $0x50] sm:$0xff] %vm1606, %v1579
        %1618 = vst.msk [vmem:[#allocation2 + $0x58] sm:$0xff] %vm1606, %v1581
        %1619 = vst.msk [vmem:[#allocation2 + $0x60] sm:$0xff] %vm1606, %v1583
        %1620 = vst.msk [vmem:[#allocation2 + $0x68] sm:$0xff] %vm1606, %v1585
        %1621 = vst.msk [vmem:[#allocation2 + $0x70] sm:$0xff] %vm1606, %v1587
        %1622 = vst.msk [vmem:[#allocation2 + $0x78] sm:$0xff] %vm1606, %v1589
        %v1623 = vld [vmem:[%s1012] sm:$0xe]
        %v1624 = vld [vmem:[%s1012 + $0x4] sm:$0xf]
        %v1625 = vld [vmem:[%s1012 + $0x8] sm:$0x1]
        %v1626 = vld [vmem:[%s1012 + $0xc] sm:$0xe]
        %v1627 = vld [vmem:[%s1012 + $0x10] sm:$0xf]
        %v1628 = vld [vmem:[%s1012 + $0x14] sm:$0x1]
        %v1629 = vld [vmem:[%s1012 + $0x18] sm:$0xe]
        %v1630 = vld [vmem:[%s1012 + $0x1c] sm:$0xf]
        %v1631 = vld [vmem:[%s1012 + $0x20] sm:$0x1]
        %v1632 = vld [vmem:[%s1012 + $0x24] sm:$0xe]
        %v1633 = vld [vmem:[%s1012 + $0x28] sm:$0xf]
        %v1634 = vld [vmem:[%s1012 + $0x2c] sm:$0x1]
        %v1635 = vld [vmem:[%s1012 + $0x30] sm:$0xe]
        %v1636 = vld [vmem:[%s1012 + $0x34] sm:$0xf]
        %v1637 = vld [vmem:[%s1012 + $0x38] sm:$0x1]
        %v1638 = vld [vmem:[%s1012 + $0x3c] sm:$0xe]
        %v1639 = vld [vmem:[%s1012 + $0x40] sm:$0xf]
        %v1640 = vld [vmem:[%s1012 + $0x44] sm:$0x1]
        %v1641 = vld [vmem:[%s1012 + $0x48] sm:$0xe]
        %v1642 = vld [vmem:[%s1012 + $0x4c] sm:$0xf]
        %v1643 = vld [vmem:[%s1012 + $0x50] sm:$0x1]
        %v1644 = vld [vmem:[%s1012 + $0x54] sm:$0xe]
        %v1645 = vld [vmem:[%s1012 + $0x58] sm:$0xf]
        %v1646 = vld [vmem:[%s1012 + $0x5c] sm:$0x1]
        %v1647 = vld [vmem:[%s1012 + $0x60] sm:$0xe]
        %v1648 = vld [vmem:[%s1012 + $0x64] sm:$0xf]
        %v1649 = vld [vmem:[%s1012 + $0x68] sm:$0x1]
        %v1650 = vld [vmem:[%s1012 + $0x6c] sm:$0xe]
        %v1651 = vld [vmem:[%s1012 + $0x70] sm:$0xf]
        %v1652 = vld [vmem:[%s1012 + $0x74] sm:$0x1]
        %v1653 = vld [vmem:[%s1012 + $0x78] sm:$0xe]
        %v1654 = vld [vmem:[%s1012 + $0x7c] sm:$0xf]
        %v1655 = vld [vmem:[%s1012 + $0x80] sm:$0x1]
        %v1656 = vld [vmem:[%s1012 + $0x84] sm:$0xe]
        %v1657 = vld [vmem:[%s1012 + $0x88] sm:$0xf]
        %v1658 = vld [vmem:[%s1012 + $0x8c] sm:$0x1]
        %v1659 = vld [vmem:[%s1012 + $0x90] sm:$0xe]
        %v1660 = vld [vmem:[%s1012 + $0x94] sm:$0xf]
        %v1661 = vld [vmem:[%s1012 + $0x98] sm:$0x1]
        %v1662 = vld [vmem:[%s1012 + $0x9c] sm:$0xe]
        %v1663 = vld [vmem:[%s1012 + $0xa0] sm:$0xf]
        %v1664 = vld [vmem:[%s1012 + $0xa4] sm:$0x1]
        %v1665 = vld [vmem:[%s1012 + $0xa8] sm:$0xe]
        %v1666 = vld [vmem:[%s1012 + $0xac] sm:$0xf]
        %v1667 = vld [vmem:[%s1012 + $0xb0] sm:$0x1]
        %v1668 = vld [vmem:[%s1012 + $0xb4] sm:$0xe]
        %v1669 = vld [vmem:[%s1012 + $0xb8] sm:$0xf]
        %v1670 = vld [vmem:[%s1012 + $0xbc] sm:$0x1]
        %v1719 = vunpack.c.l.b16 %v1623
        %v1720 = vunpack.c.l.b16 %v1624
        %v1721 = vunpack.c.l.b16 %v1625
        %v1722 = vunpack.c.l.b16 %v1626
        %v1723 = vunpack.c.l.b16 %v1627
        %v1724 = vunpack.c.l.b16 %v1628
        %v1725 = vunpack.c.l.b16 %v1629
        %v1726 = vunpack.c.l.b16 %v1630
        %v1727 = vunpack.c.l.b16 %v1631
        %v1728 = vunpack.c.l.b16 %v1632
        %v1729 = vunpack.c.l.b16 %v1633
        %v1730 = vunpack.c.l.b16 %v1634
        %v1731 = vunpack.c.l.b16 %v1635
        %v1732 = vunpack.c.l.b16 %v1636
        %v1733 = vunpack.c.l.b16 %v1637
        %v1734 = vunpack.c.l.b16 %v1638
        %v1735 = vunpack.c.l.b16 %v1639
        %v1736 = vunpack.c.l.b16 %v1640
        %v1737 = vunpack.c.l.b16 %v1641
        %v1738 = vunpack.c.l.b16 %v1642
        %v1739 = vunpack.c.l.b16 %v1643
        %v1740 = vunpack.c.l.b16 %v1644
        %v1741 = vunpack.c.l.b16 %v1645
        %v1742 = vunpack.c.l.b16 %v1646
        %v1743 = vunpack.c.l.b16 %v1647
        %v1744 = vunpack.c.l.b16 %v1648
        %v1745 = vunpack.c.l.b16 %v1649
        %v1746 = vunpack.c.l.b16 %v1650
        %v1747 = vunpack.c.l.b16 %v1651
        %v1748 = vunpack.c.l.b16 %v1652
        %v1749 = vunpack.c.l.b16 %v1653
        %v1750 = vunpack.c.l.b16 %v1654
        %v1751 = vunpack.c.l.b16 %v1655
        %v1752 = vunpack.c.l.b16 %v1656
        %v1753 = vunpack.c.l.b16 %v1657
        %v1754 = vunpack.c.l.b16 %v1658
        %v1755 = vunpack.c.l.b16 %v1659
        %v1756 = vunpack.c.l.b16 %v1660
        %v1757 = vunpack.c.l.b16 %v1661
        %v1758 = vunpack.c.l.b16 %v1662
        %v1759 = vunpack.c.l.b16 %v1663
        %v1760 = vunpack.c.l.b16 %v1664
        %v1761 = vunpack.c.l.b16 %v1665
        %v1762 = vunpack.c.l.b16 %v1666
        %v1763 = vunpack.c.l.b16 %v1667
        %v1764 = vunpack.c.l.b16 %v1668
        %v1765 = vunpack.c.l.b16 %v1669
        %v1766 = vunpack.c.l.b16 %v1670
        %v1767 = vpack.c.b16 %v1720, %v1719
        %v1768 = vpack.c.b16 %v1721, %v1721
        %v1769 = vpack.c.b16 %v1723, %v1722
        %v1770 = vpack.c.b16 %v1724, %v1724
        %v1771 = vpack.c.b16 %v1726, %v1725
        %v1772 = vpack.c.b16 %v1727, %v1727
        %v1773 = vpack.c.b16 %v1729, %v1728
        %v1774 = vpack.c.b16 %v1730, %v1730
        %v1775 = vpack.c.b16 %v1732, %v1731
        %v1776 = vpack.c.b16 %v1733, %v1733
        %v1777 = vpack.c.b16 %v1735, %v1734
        %v1778 = vpack.c.b16 %v1736, %v1736
        %v1779 = vpack.c.b16 %v1738, %v1737
        %v1780 = vpack.c.b16 %v1739, %v1739
        %v1781 = vpack.c.b16 %v1741, %v1740
        %v1782 = vpack.c.b16 %v1742, %v1742
        %v1783 = vpack.c.b16 %v1744, %v1743
        %v1784 = vpack.c.b16 %v1745, %v1745
        %v1785 = vpack.c.b16 %v1747, %v1746
        %v1786 = vpack.c.b16 %v1748, %v1748
        %v1787 = vpack.c.b16 %v1750, %v1749
        %v1788 = vpack.c.b16 %v1751, %v1751
        %v1789 = vpack.c.b16 %v1753, %v1752
        %v1790 = vpack.c.b16 %v1754, %v1754
        %v1791 = vpack.c.b16 %v1756, %v1755
        %v1792 = vpack.c.b16 %v1757, %v1757
        %v1793 = vpack.c.b16 %v1759, %v1758
        %v1794 = vpack.c.b16 %v1760, %v1760
        %v1795 = vpack.c.b16 %v1762, %v1761
        %v1796 = vpack.c.b16 %v1763, %v1763
        %v1797 = vpack.c.b16 %v1765, %v1764
        %v1798 = vpack.c.b16 %v1766, %v1766
        %v1799 = vrot.slane %v1767, 1
        %v1800 = vrot.slane %v1768, 1
        %v1801 = vsel %vm898, %v1799, %v1800
        %v1802 = vrot.slane %v1769, 1
        %v1803 = vrot.slane %v1770, 1
        %v1804 = vsel %vm898, %v1802, %v1803
        %v1805 = vrot.slane %v1771, 1
        %v1806 = vrot.slane %v1772, 1
        %v1807 = vsel %vm898, %v1805, %v1806
        %v1808 = vrot.slane %v1773, 1
        %v1809 = vrot.slane %v1774, 1
        %v1810 = vsel %vm898, %v1808, %v1809
        %v1811 = vrot.slane %v1775, 1
        %v1812 = vrot.slane %v1776, 1
        %v1813 = vsel %vm898, %v1811, %v1812
        %v1814 = vrot.slane %v1777, 1
        %v1815 = vrot.slane %v1778, 1
        %v1816 = vsel %vm898, %v1814, %v1815
        %v1817 = vrot.slane %v1779, 1
        %v1818 = vrot.slane %v1780, 1
        %v1819 = vsel %vm898, %v1817, %v1818
        %v1820 = vrot.slane %v1781, 1
        %v1821 = vrot.slane %v1782, 1
        %v1822 = vsel %vm898, %v1820, %v1821
        %v1823 = vrot.slane %v1783, 1
        %v1824 = vrot.slane %v1784, 1
        %v1825 = vsel %vm898, %v1823, %v1824
        %v1826 = vrot.slane %v1785, 1
        %v1827 = vrot.slane %v1786, 1
        %v1828 = vsel %vm898, %v1826, %v1827
        %v1829 = vrot.slane %v1787, 1
        %v1830 = vrot.slane %v1788, 1
        %v1831 = vsel %vm898, %v1829, %v1830
        %v1832 = vrot.slane %v1789, 1
        %v1833 = vrot.slane %v1790, 1
        %v1834 = vsel %vm898, %v1832, %v1833
        %v1835 = vrot.slane %v1791, 1
        %v1836 = vrot.slane %v1792, 1
        %v1837 = vsel %vm898, %v1835, %v1836
        %v1838 = vrot.slane %v1793, 1
        %v1839 = vrot.slane %v1794, 1
        %v1840 = vsel %vm898, %v1838, %v1839
        %v1841 = vrot.slane %v1795, 1
        %v1842 = vrot.slane %v1796, 1
        %v1843 = vsel %vm898, %v1841, %v1842
        %v1844 = vrot.slane %v1797, 1
        %v1845 = vrot.slane %v1798, 1
        %v1846 = vsel %vm898, %v1844, %v1845
        %1847 = vrot.lane.b32.xlu0 %v1801, 20
        %v1848 = vpop.permute.xlu0 %1847
        %1849 = vrot.lane.b32.xlu0 %v1804, 20
        %v1850 = vpop.permute.xlu0 %1849
        %1851 = vrot.lane.b32.xlu0 %v1807, 20
        %v1852 = vpop.permute.xlu0 %1851
        %1853 = vrot.lane.b32.xlu0 %v1810, 20
        %v1854 = vpop.permute.xlu0 %1853
        %1855 = vrot.lane.b32.xlu0 %v1813, 20
        %v1856 = vpop.permute.xlu0 %1855
        %1857 = vrot.lane.b32.xlu0 %v1816, 20
        %v1858 = vpop.permute.xlu0 %1857
        %1859 = vrot.lane.b32.xlu0 %v1819, 20
        %v1860 = vpop.permute.xlu0 %1859
        %1861 = vrot.lane.b32.xlu0 %v1822, 20
        %v1862 = vpop.permute.xlu0 %1861
        %1863 = vrot.lane.b32.xlu0 %v1825, 20
        %v1864 = vpop.permute.xlu0 %1863
        %1865 = vrot.lane.b32.xlu0 %v1828, 20
        %v1866 = vpop.permute.xlu0 %1865
        %1867 = vrot.lane.b32.xlu0 %v1831, 20
        %v1868 = vpop.permute.xlu0 %1867
        %1869 = vrot.lane.b32.xlu0 %v1834, 20
        %v1870 = vpop.permute.xlu0 %1869
        %1871 = vrot.lane.b32.xlu0 %v1837, 20
        %v1872 = vpop.permute.xlu0 %1871
        %1873 = vrot.lane.b32.xlu0 %v1840, 20
        %v1874 = vpop.permute.xlu0 %1873
        %1875 = vrot.lane.b32.xlu0 %v1843, 20
        %v1876 = vpop.permute.xlu0 %1875
        %1877 = vrot.lane.b32.xlu0 %v1846, 20
        %v1878 = vpop.permute.xlu0 %1877
        %vm1895 = vcmask 195744
        %1896 = vst.msk [vmem:[#allocation2] sm:$0xff] %vm1895, %v1848
        %1897 = vst.msk [vmem:[#allocation2 + $0x8] sm:$0xff] %vm1895, %v1850
        %1898 = vst.msk [vmem:[#allocation2 + $0x10] sm:$0xff] %vm1895, %v1852
        %1899 = vst.msk [vmem:[#allocation2 + $0x18] sm:$0xff] %vm1895, %v1854
        %1900 = vst.msk [vmem:[#allocation2 + $0x20] sm:$0xff] %vm1895, %v1856
        %1901 = vst.msk [vmem:[#allocation2 + $0x28] sm:$0xff] %vm1895, %v1858
        %1902 = vst.msk [vmem:[#allocation2 + $0x30] sm:$0xff] %vm1895, %v1860
        %1903 = vst.msk [vmem:[#allocation2 + $0x38] sm:$0xff] %vm1895, %v1862
        %1904 = vst.msk [vmem:[#allocation2 + $0x40] sm:$0xff] %vm1895, %v1864
        %1905 = vst.msk [vmem:[#allocation2 + $0x48] sm:$0xff] %vm1895, %v1866
        %1906 = vst.msk [vmem:[#allocation2 + $0x50] sm:$0xff] %vm1895, %v1868
        %1907 = vst.msk [vmem:[#allocation2 + $0x58] sm:$0xff] %vm1895, %v1870
        %1908 = vst.msk [vmem:[#allocation2 + $0x60] sm:$0xff] %vm1895, %v1872
        %1909 = vst.msk [vmem:[#allocation2 + $0x68] sm:$0xff] %vm1895, %v1874
        %1910 = vst.msk [vmem:[#allocation2 + $0x70] sm:$0xff] %vm1895, %v1876
        %1911 = vst.msk [vmem:[#allocation2 + $0x78] sm:$0xff] %vm1895, %v1878
        %s1912 = scalar_lea.vmem %s141, 24
        %v1913 = vld [vmem:[%s1912] sm:$0xf]
        %v1914 = vld [vmem:[%s1912 + $0x4] sm:$0xf]
        %v1915 = vld [vmem:[%s1912 + $0xc] sm:$0xf]
        %v1916 = vld [vmem:[%s1912 + $0x10] sm:$0xf]
        %v1917 = vld [vmem:[%s1912 + $0x18] sm:$0xf]
        %v1918 = vld [vmem:[%s1912 + $0x1c] sm:$0xf]
        %v1919 = vld [vmem:[%s1912 + $0x24] sm:$0xf]
        %v1920 = vld [vmem:[%s1912 + $0x28] sm:$0xf]
        %v1921 = vld [vmem:[%s1912 + $0x30] sm:$0xf]
        %v1922 = vld [vmem:[%s1912 + $0x34] sm:$0xf]
        %v1923 = vld [vmem:[%s1912 + $0x3c] sm:$0xf]
        %v1924 = vld [vmem:[%s1912 + $0x40] sm:$0xf]
        %v1925 = vld [vmem:[%s1912 + $0x48] sm:$0xf]
        %v1926 = vld [vmem:[%s1912 + $0x4c] sm:$0xf]
        %v1927 = vld [vmem:[%s1912 + $0x54] sm:$0xf]
        %v1928 = vld [vmem:[%s1912 + $0x58] sm:$0xf]
        %v1929 = vld [vmem:[%s1912 + $0x60] sm:$0xf]
        %v1930 = vld [vmem:[%s1912 + $0x64] sm:$0xf]
        %v1931 = vld [vmem:[%s1912 + $0x6c] sm:$0xf]
        %v1932 = vld [vmem:[%s1912 + $0x70] sm:$0xf]
        %v1933 = vld [vmem:[%s1912 + $0x78] sm:$0xf]
        %v1934 = vld [vmem:[%s1912 + $0x7c] sm:$0xf]
        %v1935 = vld [vmem:[%s1912 + $0x84] sm:$0xf]
        %v1936 = vld [vmem:[%s1912 + $0x88] sm:$0xf]
        %v1937 = vld [vmem:[%s1912 + $0x90] sm:$0xf]
        %v1938 = vld [vmem:[%s1912 + $0x94] sm:$0xf]
        %v1939 = vld [vmem:[%s1912 + $0x9c] sm:$0xf]
        %v1940 = vld [vmem:[%s1912 + $0xa0] sm:$0xf]
        %v1941 = vld [vmem:[%s1912 + $0xa8] sm:$0xf]
        %v1942 = vld [vmem:[%s1912 + $0xac] sm:$0xf]
        %v1943 = vld [vmem:[%s1912 + $0xb4] sm:$0xf]
        %v1944 = vld [vmem:[%s1912 + $0xb8] sm:$0xf]
        %v1977 = vunpack.c.l.b16 %v1913
        %v1978 = vunpack.c.l.b16 %v1914
        %v1979 = vunpack.c.l.b16 %v1915
        %v1980 = vunpack.c.l.b16 %v1916
        %v1981 = vunpack.c.l.b16 %v1917
        %v1982 = vunpack.c.l.b16 %v1918
        %v1983 = vunpack.c.l.b16 %v1919
        %v1984 = vunpack.c.l.b16 %v1920
        %v1985 = vunpack.c.l.b16 %v1921
        %v1986 = vunpack.c.l.b16 %v1922
        %v1987 = vunpack.c.l.b16 %v1923
        %v1988 = vunpack.c.l.b16 %v1924
        %v1989 = vunpack.c.l.b16 %v1925
        %v1990 = vunpack.c.l.b16 %v1926
        %v1991 = vunpack.c.l.b16 %v1927
        %v1992 = vunpack.c.l.b16 %v1928
        %v1993 = vunpack.c.l.b16 %v1929
        %v1994 = vunpack.c.l.b16 %v1930
        %v1995 = vunpack.c.l.b16 %v1931
        %v1996 = vunpack.c.l.b16 %v1932
        %v1997 = vunpack.c.l.b16 %v1933
        %v1998 = vunpack.c.l.b16 %v1934
        %v1999 = vunpack.c.l.b16 %v1935
        %v2000 = vunpack.c.l.b16 %v1936
        %v2001 = vunpack.c.l.b16 %v1937
        %v2002 = vunpack.c.l.b16 %v1938
        %v2003 = vunpack.c.l.b16 %v1939
        %v2004 = vunpack.c.l.b16 %v1940
        %v2005 = vunpack.c.l.b16 %v1941
        %v2006 = vunpack.c.l.b16 %v1942
        %v2007 = vunpack.c.l.b16 %v1943
        %v2008 = vunpack.c.l.b16 %v1944
        %v2009 = vpack.c.b16 %v1978, %v1977
        %v2010 = vpack.c.b16 %v1980, %v1979
        %v2011 = vpack.c.b16 %v1982, %v1981
        %v2012 = vpack.c.b16 %v1984, %v1983
        %v2013 = vpack.c.b16 %v1986, %v1985
        %v2014 = vpack.c.b16 %v1988, %v1987
        %v2015 = vpack.c.b16 %v1990, %v1989
        %v2016 = vpack.c.b16 %v1992, %v1991
        %v2017 = vpack.c.b16 %v1994, %v1993
        %v2018 = vpack.c.b16 %v1996, %v1995
        %v2019 = vpack.c.b16 %v1998, %v1997
        %v2020 = vpack.c.b16 %v2000, %v1999
        %v2021 = vpack.c.b16 %v2002, %v2001
        %v2022 = vpack.c.b16 %v2004, %v2003
        %v2023 = vpack.c.b16 %v2006, %v2005
        %v2024 = vpack.c.b16 %v2008, %v2007
        %2025 = vrot.lane.b32.xlu0 %v2009, 24
        %v2026 = vpop.permute.xlu0 %2025
        %2027 = vrot.lane.b32.xlu0 %v2010, 24
        %v2028 = vpop.permute.xlu0 %2027
        %2029 = vrot.lane.b32.xlu0 %v2011, 24
        %v2030 = vpop.permute.xlu0 %2029
        %2031 = vrot.lane.b32.xlu0 %v2012, 24
        %v2032 = vpop.permute.xlu0 %2031
        %2033 = vrot.lane.b32.xlu0 %v2013, 24
        %v2034 = vpop.permute.xlu0 %2033
        %2035 = vrot.lane.b32.xlu0 %v2014, 24
        %v2036 = vpop.permute.xlu0 %2035
        %2037 = vrot.lane.b32.xlu0 %v2015, 24
        %v2038 = vpop.permute.xlu0 %2037
        %2039 = vrot.lane.b32.xlu0 %v2016, 24
        %v2040 = vpop.permute.xlu0 %2039
        %2041 = vrot.lane.b32.xlu0 %v2017, 24
        %v2042 = vpop.permute.xlu0 %2041
        %2043 = vrot.lane.b32.xlu0 %v2018, 24
        %v2044 = vpop.permute.xlu0 %2043
        %2045 = vrot.lane.b32.xlu0 %v2019, 24
        %v2046 = vpop.permute.xlu0 %2045
        %2047 = vrot.lane.b32.xlu0 %v2020, 24
        %v2048 = vpop.permute.xlu0 %2047
        %2049 = vrot.lane.b32.xlu0 %v2021, 24
        %v2050 = vpop.permute.xlu0 %2049
        %2051 = vrot.lane.b32.xlu0 %v2022, 24
        %v2052 = vpop.permute.xlu0 %2051
        %2053 = vrot.lane.b32.xlu0 %v2023, 24
        %v2054 = vpop.permute.xlu0 %2053
        %2055 = vrot.lane.b32.xlu0 %v2024, 24
        %v2056 = vpop.permute.xlu0 %2055
        %vm2073 = vcmask 228544
        %2074 = vst.msk [vmem:[#allocation2] sm:$0xff] %vm2073, %v2026
        %2075 = vst.msk [vmem:[#allocation2 + $0x8] sm:$0xff] %vm2073, %v2028
        %2076 = vst.msk [vmem:[#allocation2 + $0x10] sm:$0xff] %vm2073, %v2030
        %2077 = vst.msk [vmem:[#allocation2 + $0x18] sm:$0xff] %vm2073, %v2032
        %2078 = vst.msk [vmem:[#allocation2 + $0x20] sm:$0xff] %vm2073, %v2034
        %2079 = vst.msk [vmem:[#allocation2 + $0x28] sm:$0xff] %vm2073, %v2036
        %2080 = vst.msk [vmem:[#allocation2 + $0x30] sm:$0xff] %vm2073, %v2038
        %2081 = vst.msk [vmem:[#allocation2 + $0x38] sm:$0xff] %vm2073, %v2040
        %2082 = vst.msk [vmem:[#allocation2 + $0x40] sm:$0xff] %vm2073, %v2042
        %2083 = vst.msk [vmem:[#allocation2 + $0x48] sm:$0xff] %vm2073, %v2044
        %2084 = vst.msk [vmem:[#allocation2 + $0x50] sm:$0xff] %vm2073, %v2046
        %2085 = vst.msk [vmem:[#allocation2 + $0x58] sm:$0xff] %vm2073, %v2048
        %2086 = vst.msk [vmem:[#allocation2 + $0x60] sm:$0xff] %vm2073, %v2050
        %2087 = vst.msk [vmem:[#allocation2 + $0x68] sm:$0xff] %vm2073, %v2052
        %2088 = vst.msk [vmem:[#allocation2 + $0x70] sm:$0xff] %vm2073, %v2054
        %2089 = vst.msk [vmem:[#allocation2 + $0x78] sm:$0xff] %vm2073, %v2056
        %v2090 = vld [vmem:[%s1912] sm:$0xf]
        %v2091 = vld [vmem:[%s1912 + $0x4] sm:$0xf]
        %v2092 = vld [vmem:[%s1912 + $0x8] sm:$0x1]
        %v2093 = vld [vmem:[%s1912 + $0xc] sm:$0xf]
        %v2094 = vld [vmem:[%s1912 + $0x10] sm:$0xf]
        %v2095 = vld [vmem:[%s1912 + $0x14] sm:$0x1]
        %v2096 = vld [vmem:[%s1912 + $0x18] sm:$0xf]
        %v2097 = vld [vmem:[%s1912 + $0x1c] sm:$0xf]
        %v2098 = vld [vmem:[%s1912 + $0x20] sm:$0x1]
        %v2099 = vld [vmem:[%s1912 + $0x24] sm:$0xf]
        %v2100 = vld [vmem:[%s1912 + $0x28] sm:$0xf]
        %v2101 = vld [vmem:[%s1912 + $0x2c] sm:$0x1]
        %v2102 = vld [vmem:[%s1912 + $0x30] sm:$0xf]
        %v2103 = vld [vmem:[%s1912 + $0x34] sm:$0xf]
        %v2104 = vld [vmem:[%s1912 + $0x38] sm:$0x1]
        %v2105 = vld [vmem:[%s1912 + $0x3c] sm:$0xf]
        %v2106 = vld [vmem:[%s1912 + $0x40] sm:$0xf]
        %v2107 = vld [vmem:[%s1912 + $0x44] sm:$0x1]
        %v2108 = vld [vmem:[%s1912 + $0x48] sm:$0xf]
        %v2109 = vld [vmem:[%s1912 + $0x4c] sm:$0xf]
        %v2110 = vld [vmem:[%s1912 + $0x50] sm:$0x1]
        %v2111 = vld [vmem:[%s1912 + $0x54] sm:$0xf]
        %v2112 = vld [vmem:[%s1912 + $0x58] sm:$0xf]
        %v2113 = vld [vmem:[%s1912 + $0x5c] sm:$0x1]
        %v2114 = vld [vmem:[%s1912 + $0x60] sm:$0xf]
        %v2115 = vld [vmem:[%s1912 + $0x64] sm:$0xf]
        %v2116 = vld [vmem:[%s1912 + $0x68] sm:$0x1]
        %v2117 = vld [vmem:[%s1912 + $0x6c] sm:$0xf]
        %v2118 = vld [vmem:[%s1912 + $0x70] sm:$0xf]
        %v2119 = vld [vmem:[%s1912 + $0x74] sm:$0x1]
        %v2120 = vld [vmem:[%s1912 + $0x78] sm:$0xf]
        %v2121 = vld [vmem:[%s1912 + $0x7c] sm:$0xf]
        %v2122 = vld [vmem:[%s1912 + $0x80] sm:$0x1]
        %v2123 = vld [vmem:[%s1912 + $0x84] sm:$0xf]
        %v2124 = vld [vmem:[%s1912 + $0x88] sm:$0xf]
        %v2125 = vld [vmem:[%s1912 + $0x8c] sm:$0x1]
        %v2126 = vld [vmem:[%s1912 + $0x90] sm:$0xf]
        %v2127 = vld [vmem:[%s1912 + $0x94] sm:$0xf]
        %v2128 = vld [vmem:[%s1912 + $0x98] sm:$0x1]
        %v2129 = vld [vmem:[%s1912 + $0x9c] sm:$0xf]
        %v2130 = vld [vmem:[%s1912 + $0xa0] sm:$0xf]
        %v2131 = vld [vmem:[%s1912 + $0xa4] sm:$0x1]
        %v2132 = vld [vmem:[%s1912 + $0xa8] sm:$0xf]
        %v2133 = vld [vmem:[%s1912 + $0xac] sm:$0xf]
        %v2134 = vld [vmem:[%s1912 + $0xb0] sm:$0x1]
        %v2135 = vld [vmem:[%s1912 + $0xb4] sm:$0xf]
        %v2136 = vld [vmem:[%s1912 + $0xb8] sm:$0xf]
        %v2137 = vld [vmem:[%s1912 + $0xbc] sm:$0x1]
        %v2186 = vunpack.c.l.b16 %v2090
        %v2187 = vunpack.c.l.b16 %v2091
        %v2188 = vunpack.c.l.b16 %v2092
        %v2189 = vunpack.c.l.b16 %v2093
        %v2190 = vunpack.c.l.b16 %v2094
        %v2191 = vunpack.c.l.b16 %v2095
        %v2192 = vunpack.c.l.b16 %v2096
        %v2193 = vunpack.c.l.b16 %v2097
        %v2194 = vunpack.c.l.b16 %v2098
        %v2195 = vunpack.c.l.b16 %v2099
        %v2196 = vunpack.c.l.b16 %v2100
        %v2197 = vunpack.c.l.b16 %v2101
        %v2198 = vunpack.c.l.b16 %v2102
        %v2199 = vunpack.c.l.b16 %v2103
        %v2200 = vunpack.c.l.b16 %v2104
        %v2201 = vunpack.c.l.b16 %v2105
        %v2202 = vunpack.c.l.b16 %v2106
        %v2203 = vunpack.c.l.b16 %v2107
        %v2204 = vunpack.c.l.b16 %v2108
        %v2205 = vunpack.c.l.b16 %v2109
        %v2206 = vunpack.c.l.b16 %v2110
        %v2207 = vunpack.c.l.b16 %v2111
        %v2208 = vunpack.c.l.b16 %v2112
        %v2209 = vunpack.c.l.b16 %v2113
        %v2210 = vunpack.c.l.b16 %v2114
        %v2211 = vunpack.c.l.b16 %v2115
        %v2212 = vunpack.c.l.b16 %v2116
        %v2213 = vunpack.c.l.b16 %v2117
        %v2214 = vunpack.c.l.b16 %v2118
        %v2215 = vunpack.c.l.b16 %v2119
        %v2216 = vunpack.c.l.b16 %v2120
        %v2217 = vunpack.c.l.b16 %v2121
        %v2218 = vunpack.c.l.b16 %v2122
        %v2219 = vunpack.c.l.b16 %v2123
        %v2220 = vunpack.c.l.b16 %v2124
        %v2221 = vunpack.c.l.b16 %v2125
        %v2222 = vunpack.c.l.b16 %v2126
        %v2223 = vunpack.c.l.b16 %v2127
        %v2224 = vunpack.c.l.b16 %v2128
        %v2225 = vunpack.c.l.b16 %v2129
        %v2226 = vunpack.c.l.b16 %v2130
        %v2227 = vunpack.c.l.b16 %v2131
        %v2228 = vunpack.c.l.b16 %v2132
        %v2229 = vunpack.c.l.b16 %v2133
        %v2230 = vunpack.c.l.b16 %v2134
        %v2231 = vunpack.c.l.b16 %v2135
        %v2232 = vunpack.c.l.b16 %v2136
        %v2233 = vunpack.c.l.b16 %v2137
        %v2234 = vpack.c.b16 %v2187, %v2186
        %v2235 = vpack.c.b16 %v2188, %v2188
        %v2236 = vpack.c.b16 %v2190, %v2189
        %v2237 = vpack.c.b16 %v2191, %v2191
        %v2238 = vpack.c.b16 %v2193, %v2192
        %v2239 = vpack.c.b16 %v2194, %v2194
        %v2240 = vpack.c.b16 %v2196, %v2195
        %v2241 = vpack.c.b16 %v2197, %v2197
        %v2242 = vpack.c.b16 %v2199, %v2198
        %v2243 = vpack.c.b16 %v2200, %v2200
        %v2244 = vpack.c.b16 %v2202, %v2201
        %v2245 = vpack.c.b16 %v2203, %v2203
        %v2246 = vpack.c.b16 %v2205, %v2204
        %v2247 = vpack.c.b16 %v2206, %v2206
        %v2248 = vpack.c.b16 %v2208, %v2207
        %v2249 = vpack.c.b16 %v2209, %v2209
        %v2250 = vpack.c.b16 %v2211, %v2210
        %v2251 = vpack.c.b16 %v2212, %v2212
        %v2252 = vpack.c.b16 %v2214, %v2213
        %v2253 = vpack.c.b16 %v2215, %v2215
        %v2254 = vpack.c.b16 %v2217, %v2216
        %v2255 = vpack.c.b16 %v2218, %v2218
        %v2256 = vpack.c.b16 %v2220, %v2219
        %v2257 = vpack.c.b16 %v2221, %v2221
        %v2258 = vpack.c.b16 %v2223, %v2222
        %v2259 = vpack.c.b16 %v2224, %v2224
        %v2260 = vpack.c.b16 %v2226, %v2225
        %v2261 = vpack.c.b16 %v2227, %v2227
        %v2262 = vpack.c.b16 %v2229, %v2228
        %v2263 = vpack.c.b16 %v2230, %v2230
        %v2264 = vpack.c.b16 %v2232, %v2231
        %v2265 = vpack.c.b16 %v2233, %v2233
        %v2267 = vshrl.u32 %v2234, 16
        %v2269 = vshll.u32 %v2234, 16
        %v2271 = vrot.slane %v2269, 1
        %v2272 = vor.u32 %v2267, %v2271
        %v2274 = vshll.u32 %v2235, 16
        %v2276 = vrot.slane %v2274, 1
        %v2277 = vsel %vm464, %v2272, %v2276
        %v2279 = vshrl.u32 %v2236, 16
        %v2281 = vshll.u32 %v2236, 16
        %v2283 = vrot.slane %v2281, 1
        %v2284 = vor.u32 %v2279, %v2283
        %v2286 = vshll.u32 %v2237, 16
        %v2288 = vrot.slane %v2286, 1
        %v2289 = vsel %vm464, %v2284, %v2288
        %v2291 = vshrl.u32 %v2238, 16
        %v2293 = vshll.u32 %v2238, 16
        %v2295 = vrot.slane %v2293, 1
        %v2296 = vor.u32 %v2291, %v2295
        %v2298 = vshll.u32 %v2239, 16
        %v2300 = vrot.slane %v2298, 1
        %v2301 = vsel %vm464, %v2296, %v2300
        %v2303 = vshrl.u32 %v2240, 16
        %v2305 = vshll.u32 %v2240, 16
        %v2307 = vrot.slane %v2305, 1
        %v2308 = vor.u32 %v2303, %v2307
        %v2310 = vshll.u32 %v2241, 16
        %v2312 = vrot.slane %v2310, 1
        %v2313 = vsel %vm464, %v2308, %v2312
        %v2315 = vshrl.u32 %v2242, 16
        %v2317 = vshll.u32 %v2242, 16
        %v2319 = vrot.slane %v2317, 1
        %v2320 = vor.u32 %v2315, %v2319
        %v2322 = vshll.u32 %v2243, 16
        %v2324 = vrot.slane %v2322, 1
        %v2325 = vsel %vm464, %v2320, %v2324
        %v2327 = vshrl.u32 %v2244, 16
        %v2329 = vshll.u32 %v2244, 16
        %v2331 = vrot.slane %v2329, 1
        %v2332 = vor.u32 %v2327, %v2331
        %v2334 = vshll.u32 %v2245, 16
        %v2336 = vrot.slane %v2334, 1
        %v2337 = vsel %vm464, %v2332, %v2336
        %v2339 = vshrl.u32 %v2246, 16
        %v2341 = vshll.u32 %v2246, 16
        %v2343 = vrot.slane %v2341, 1
        %v2344 = vor.u32 %v2339, %v2343
        %v2346 = vshll.u32 %v2247, 16
        %v2348 = vrot.slane %v2346, 1
        %v2349 = vsel %vm464, %v2344, %v2348
        %v2351 = vshrl.u32 %v2248, 16
        %v2353 = vshll.u32 %v2248, 16
        %v2355 = vrot.slane %v2353, 1
        %v2356 = vor.u32 %v2351, %v2355
        %v2358 = vshll.u32 %v2249, 16
        %v2360 = vrot.slane %v2358, 1
        %v2361 = vsel %vm464, %v2356, %v2360
        %v2363 = vshrl.u32 %v2250, 16
        %v2365 = vshll.u32 %v2250, 16
        %v2367 = vrot.slane %v2365, 1
        %v2368 = vor.u32 %v2363, %v2367
        %v2370 = vshll.u32 %v2251, 16
        %v2372 = vrot.slane %v2370, 1
        %v2373 = vsel %vm464, %v2368, %v2372
        %v2375 = vshrl.u32 %v2252, 16
        %v2377 = vshll.u32 %v2252, 16
        %v2379 = vrot.slane %v2377, 1
        %v2380 = vor.u32 %v2375, %v2379
        %v2382 = vshll.u32 %v2253, 16
        %v2384 = vrot.slane %v2382, 1
        %v2385 = vsel %vm464, %v2380, %v2384
        %v2387 = vshrl.u32 %v2254, 16
        %v2389 = vshll.u32 %v2254, 16
        %v2391 = vrot.slane %v2389, 1
        %v2392 = vor.u32 %v2387, %v2391
        %v2394 = vshll.u32 %v2255, 16
        %v2396 = vrot.slane %v2394, 1
        %v2397 = vsel %vm464, %v2392, %v2396
        %v2399 = vshrl.u32 %v2256, 16
        %v2401 = vshll.u32 %v2256, 16
        %v2403 = vrot.slane %v2401, 1
        %v2404 = vor.u32 %v2399, %v2403
        %v2406 = vshll.u32 %v2257, 16
        %v2408 = vrot.slane %v2406, 1
        %v2409 = vsel %vm464, %v2404, %v2408
        %v2411 = vshrl.u32 %v2258, 16
        %v2413 = vshll.u32 %v2258, 16
        %v2415 = vrot.slane %v2413, 1
        %v2416 = vor.u32 %v2411, %v2415
        %v2418 = vshll.u32 %v2259, 16
        %v2420 = vrot.slane %v2418, 1
        %v2421 = vsel %vm464, %v2416, %v2420
        %v2423 = vshrl.u32 %v2260, 16
        %v2425 = vshll.u32 %v2260, 16
        %v2427 = vrot.slane %v2425, 1
        %v2428 = vor.u32 %v2423, %v2427
        %v2430 = vshll.u32 %v2261, 16
        %v2432 = vrot.slane %v2430, 1
        %v2433 = vsel %vm464, %v2428, %v2432
        %v2435 = vshrl.u32 %v2262, 16
        %v2437 = vshll.u32 %v2262, 16
        %v2439 = vrot.slane %v2437, 1
        %v2440 = vor.u32 %v2435, %v2439
        %v2442 = vshll.u32 %v2263, 16
        %v2444 = vrot.slane %v2442, 1
        %v2445 = vsel %vm464, %v2440, %v2444
        %v2447 = vshrl.u32 %v2264, 16
        %v2449 = vshll.u32 %v2264, 16
        %v2451 = vrot.slane %v2449, 1
        %v2452 = vor.u32 %v2447, %v2451
        %v2454 = vshll.u32 %v2265, 16
        %v2456 = vrot.slane %v2454, 1
        %v2457 = vsel %vm464, %v2452, %v2456
        %2458 = vrot.lane.b32.xlu0 %v2277, 28
        %v2459 = vpop.permute.xlu0 %2458
        %2460 = vrot.lane.b32.xlu0 %v2289, 28
        %v2461 = vpop.permute.xlu0 %2460
        %2462 = vrot.lane.b32.xlu0 %v2301, 28
        %v2463 = vpop.permute.xlu0 %2462
        %2464 = vrot.lane.b32.xlu0 %v2313, 28
        %v2465 = vpop.permute.xlu0 %2464
        %2466 = vrot.lane.b32.xlu0 %v2325, 28
        %v2467 = vpop.permute.xlu0 %2466
        %2468 = vrot.lane.b32.xlu0 %v2337, 28
        %v2469 = vpop.permute.xlu0 %2468
        %2470 = vrot.lane.b32.xlu0 %v2349, 28
        %v2471 = vpop.permute.xlu0 %2470
        %2472 = vrot.lane.b32.xlu0 %v2361, 28
        %v2473 = vpop.permute.xlu0 %2472
        %2474 = vrot.lane.b32.xlu0 %v2373, 28
        %v2475 = vpop.permute.xlu0 %2474
        %2476 = vrot.lane.b32.xlu0 %v2385, 28
        %v2477 = vpop.permute.xlu0 %2476
        %2478 = vrot.lane.b32.xlu0 %v2397, 28
        %v2479 = vpop.permute.xlu0 %2478
        %2480 = vrot.lane.b32.xlu0 %v2409, 28
        %v2481 = vpop.permute.xlu0 %2480
        %2482 = vrot.lane.b32.xlu0 %v2421, 28
        %v2483 = vpop.permute.xlu0 %2482
        %2484 = vrot.lane.b32.xlu0 %v2433, 28
        %v2485 = vpop.permute.xlu0 %2484
        %2486 = vrot.lane.b32.xlu0 %v2445, 28
        %v2487 = vpop.permute.xlu0 %2486
        %2488 = vrot.lane.b32.xlu0 %v2457, 28
        %v2489 = vpop.permute.xlu0 %2488
        %vm2506 = vcmask 261344
        %2507 = vst.msk [vmem:[#allocation2] sm:$0xff] %vm2506, %v2459
        %2508 = vst.msk [vmem:[#allocation2 + $0x8] sm:$0xff] %vm2506, %v2461
        %2509 = vst.msk [vmem:[#allocation2 + $0x10] sm:$0xff] %vm2506, %v2463
        %2510 = vst.msk [vmem:[#allocation2 + $0x18] sm:$0xff] %vm2506, %v2465
        %2511 = vst.msk [vmem:[#allocation2 + $0x20] sm:$0xff] %vm2506, %v2467
        %2512 = vst.msk [vmem:[#allocation2 + $0x28] sm:$0xff] %vm2506, %v2469
        %2513 = vst.msk [vmem:[#allocation2 + $0x30] sm:$0xff] %vm2506, %v2471
        %2514 = vst.msk [vmem:[#allocation2 + $0x38] sm:$0xff] %vm2506, %v2473
        %2515 = vst.msk [vmem:[#allocation2 + $0x40] sm:$0xff] %vm2506, %v2475
        %2516 = vst.msk [vmem:[#allocation2 + $0x48] sm:$0xff] %vm2506, %v2477
        %2517 = vst.msk [vmem:[#allocation2 + $0x50] sm:$0xff] %vm2506, %v2479
        %2518 = vst.msk [vmem:[#allocation2 + $0x58] sm:$0xff] %vm2506, %v2481
        %2519 = vst.msk [vmem:[#allocation2 + $0x60] sm:$0xff] %vm2506, %v2483
        %2520 = vst.msk [vmem:[#allocation2 + $0x68] sm:$0xff] %vm2506, %v2485
        %2521 = vst.msk [vmem:[#allocation2 + $0x70] sm:$0xff] %vm2506, %v2487
        %2522 = vst.msk [vmem:[#allocation2 + $0x78] sm:$0xff] %vm2506, %v2489
        %v2523 = vld [vmem:[%s1912] sm:$0xe]
        %v2524 = vld [vmem:[%s1912 + $0x4] sm:$0xf]
        %v2525 = vld [vmem:[%s1912 + $0x8] sm:$0x1]
        %v2526 = vld [vmem:[%s1912 + $0xc] sm:$0xe]
        %v2527 = vld [vmem:[%s1912 + $0x10] sm:$0xf]
        %v2528 = vld [vmem:[%s1912 + $0x14] sm:$0x1]
        %v2529 = vld [vmem:[%s1912 + $0x18] sm:$0xe]
        %v2530 = vld [vmem:[%s1912 + $0x1c] sm:$0xf]
        %v2531 = vld [vmem:[%s1912 + $0x20] sm:$0x1]
        %v2532 = vld [vmem:[%s1912 + $0x24] sm:$0xe]
        %v2533 = vld [vmem:[%s1912 + $0x28] sm:$0xf]
        %v2534 = vld [vmem:[%s1912 + $0x2c] sm:$0x1]
        %v2535 = vld [vmem:[%s1912 + $0x30] sm:$0xe]
        %v2536 = vld [vmem:[%s1912 + $0x34] sm:$0xf]
        %v2537 = vld [vmem:[%s1912 + $0x38] sm:$0x1]
        %v2538 = vld [vmem:[%s1912 + $0x3c] sm:$0xe]
        %v2539 = vld [vmem:[%s1912 + $0x40] sm:$0xf]
        %v2540 = vld [vmem:[%s1912 + $0x44] sm:$0x1]
        %v2541 = vld [vmem:[%s1912 + $0x48] sm:$0xe]
        %v2542 = vld [vmem:[%s1912 + $0x4c] sm:$0xf]
        %v2543 = vld [vmem:[%s1912 + $0x50] sm:$0x1]
        %v2544 = vld [vmem:[%s1912 + $0x54] sm:$0xe]
        %v2545 = vld [vmem:[%s1912 + $0x58] sm:$0xf]
        %v2546 = vld [vmem:[%s1912 + $0x5c] sm:$0x1]
        %v2547 = vld [vmem:[%s1912 + $0x60] sm:$0xe]
        %v2548 = vld [vmem:[%s1912 + $0x64] sm:$0xf]
        %v2549 = vld [vmem:[%s1912 + $0x68] sm:$0x1]
        %v2550 = vld [vmem:[%s1912 + $0x6c] sm:$0xe]
        %v2551 = vld [vmem:[%s1912 + $0x70] sm:$0xf]
        %v2552 = vld [vmem:[%s1912 + $0x74] sm:$0x1]
        %v2553 = vld [vmem:[%s1912 + $0x78] sm:$0xe]
        %v2554 = vld [vmem:[%s1912 + $0x7c] sm:$0xf]
        %v2555 = vld [vmem:[%s1912 + $0x80] sm:$0x1]
        %v2556 = vld [vmem:[%s1912 + $0x84] sm:$0xe]
        %v2557 = vld [vmem:[%s1912 + $0x88] sm:$0xf]
        %v2558 = vld [vmem:[%s1912 + $0x8c] sm:$0x1]
        %v2559 = vld [vmem:[%s1912 + $0x90] sm:$0xe]
        %v2560 = vld [vmem:[%s1912 + $0x94] sm:$0xf]
        %v2561 = vld [vmem:[%s1912 + $0x98] sm:$0x1]
        %v2562 = vld [vmem:[%s1912 + $0x9c] sm:$0xe]
        %v2563 = vld [vmem:[%s1912 + $0xa0] sm:$0xf]
        %v2564 = vld [vmem:[%s1912 + $0xa4] sm:$0x1]
        %v2565 = vld [vmem:[%s1912 + $0xa8] sm:$0xe]
        %v2566 = vld [vmem:[%s1912 + $0xac] sm:$0xf]
        %v2567 = vld [vmem:[%s1912 + $0xb0] sm:$0x1]
        %v2568 = vld [vmem:[%s1912 + $0xb4] sm:$0xe]
        %v2569 = vld [vmem:[%s1912 + $0xb8] sm:$0xf]
        %v2570 = vld [vmem:[%s1912 + $0xbc] sm:$0x1]
        %v2619 = vunpack.c.l.b16 %v2523
        %v2620 = vunpack.c.l.b16 %v2524
        %v2621 = vunpack.c.l.b16 %v2525
        %v2622 = vunpack.c.l.b16 %v2526
        %v2623 = vunpack.c.l.b16 %v2527
        %v2624 = vunpack.c.l.b16 %v2528
        %v2625 = vunpack.c.l.b16 %v2529
        %v2626 = vunpack.c.l.b16 %v2530
        %v2627 = vunpack.c.l.b16 %v2531
        %v2628 = vunpack.c.l.b16 %v2532
        %v2629 = vunpack.c.l.b16 %v2533
        %v2630 = vunpack.c.l.b16 %v2534
        %v2631 = vunpack.c.l.b16 %v2535
        %v2632 = vunpack.c.l.b16 %v2536
        %v2633 = vunpack.c.l.b16 %v2537
        %v2634 = vunpack.c.l.b16 %v2538
        %v2635 = vunpack.c.l.b16 %v2539
        %v2636 = vunpack.c.l.b16 %v2540
        %v2637 = vunpack.c.l.b16 %v2541
        %v2638 = vunpack.c.l.b16 %v2542
        %v2639 = vunpack.c.l.b16 %v2543
        %v2640 = vunpack.c.l.b16 %v2544
        %v2641 = vunpack.c.l.b16 %v2545
        %v2642 = vunpack.c.l.b16 %v2546
        %v2643 = vunpack.c.l.b16 %v2547
        %v2644 = vunpack.c.l.b16 %v2548
        %v2645 = vunpack.c.l.b16 %v2549
        %v2646 = vunpack.c.l.b16 %v2550
        %v2647 = vunpack.c.l.b16 %v2551
        %v2648 = vunpack.c.l.b16 %v2552
        %v2649 = vunpack.c.l.b16 %v2553
        %v2650 = vunpack.c.l.b16 %v2554
        %v2651 = vunpack.c.l.b16 %v2555
        %v2652 = vunpack.c.l.b16 %v2556
        %v2653 = vunpack.c.l.b16 %v2557
        %v2654 = vunpack.c.l.b16 %v2558
        %v2655 = vunpack.c.l.b16 %v2559
        %v2656 = vunpack.c.l.b16 %v2560
        %v2657 = vunpack.c.l.b16 %v2561
        %v2658 = vunpack.c.l.b16 %v2562
        %v2659 = vunpack.c.l.b16 %v2563
        %v2660 = vunpack.c.l.b16 %v2564
        %v2661 = vunpack.c.l.b16 %v2565
        %v2662 = vunpack.c.l.b16 %v2566
        %v2663 = vunpack.c.l.b16 %v2567
        %v2664 = vunpack.c.l.b16 %v2568
        %v2665 = vunpack.c.l.b16 %v2569
        %v2666 = vunpack.c.l.b16 %v2570
        %v2667 = vpack.c.b16 %v2620, %v2619
        %v2668 = vpack.c.b16 %v2621, %v2621
        %v2669 = vpack.c.b16 %v2623, %v2622
        %v2670 = vpack.c.b16 %v2624, %v2624
        %v2671 = vpack.c.b16 %v2626, %v2625
        %v2672 = vpack.c.b16 %v2627, %v2627
        %v2673 = vpack.c.b16 %v2629, %v2628
        %v2674 = vpack.c.b16 %v2630, %v2630
        %v2675 = vpack.c.b16 %v2632, %v2631
        %v2676 = vpack.c.b16 %v2633, %v2633
        %v2677 = vpack.c.b16 %v2635, %v2634
        %v2678 = vpack.c.b16 %v2636, %v2636
        %v2679 = vpack.c.b16 %v2638, %v2637
        %v2680 = vpack.c.b16 %v2639, %v2639
        %v2681 = vpack.c.b16 %v2641, %v2640
        %v2682 = vpack.c.b16 %v2642, %v2642
        %v2683 = vpack.c.b16 %v2644, %v2643
        %v2684 = vpack.c.b16 %v2645, %v2645
        %v2685 = vpack.c.b16 %v2647, %v2646
        %v2686 = vpack.c.b16 %v2648, %v2648
        %v2687 = vpack.c.b16 %v2650, %v2649
        %v2688 = vpack.c.b16 %v2651, %v2651
        %v2689 = vpack.c.b16 %v2653, %v2652
        %v2690 = vpack.c.b16 %v2654, %v2654
        %v2691 = vpack.c.b16 %v2656, %v2655
        %v2692 = vpack.c.b16 %v2657, %v2657
        %v2693 = vpack.c.b16 %v2659, %v2658
        %v2694 = vpack.c.b16 %v2660, %v2660
        %v2695 = vpack.c.b16 %v2662, %v2661
        %v2696 = vpack.c.b16 %v2663, %v2663
        %v2697 = vpack.c.b16 %v2665, %v2664
        %v2698 = vpack.c.b16 %v2666, %v2666
        %v2699 = vrot.slane %v2667, 1
        %v2700 = vrot.slane %v2668, 1
        %v2701 = vsel %vm898, %v2699, %v2700
        %v2702 = vrot.slane %v2669, 1
        %v2703 = vrot.slane %v2670, 1
        %v2704 = vsel %vm898, %v2702, %v2703
        %v2705 = vrot.slane %v2671, 1
        %v2706 = vrot.slane %v2672, 1
        %v2707 = vsel %vm898, %v2705, %v2706
        %v2708 = vrot.slane %v2673, 1
        %v2709 = vrot.slane %v2674, 1
        %v2710 = vsel %vm898, %v2708, %v2709
        %v2711 = vrot.slane %v2675, 1
        %v2712 = vrot.slane %v2676, 1
        %v2713 = vsel %vm898, %v2711, %v2712
        %v2714 = vrot.slane %v2677, 1
        %v2715 = vrot.slane %v2678, 1
        %v2716 = vsel %vm898, %v2714, %v2715
        %v2717 = vrot.slane %v2679, 1
        %v2718 = vrot.slane %v2680, 1
        %v2719 = vsel %vm898, %v2717, %v2718
        %v2720 = vrot.slane %v2681, 1
        %v2721 = vrot.slane %v2682, 1
        %v2722 = vsel %vm898, %v2720, %v2721
        %v2723 = vrot.slane %v2683, 1
        %v2724 = vrot.slane %v2684, 1
        %v2725 = vsel %vm898, %v2723, %v2724
        %v2726 = vrot.slane %v2685, 1
        %v2727 = vrot.slane %v2686, 1
        %v2728 = vsel %vm898, %v2726, %v2727
        %v2729 = vrot.slane %v2687, 1
        %v2730 = vrot.slane %v2688, 1
        %v2731 = vsel %vm898, %v2729, %v2730
        %v2732 = vrot.slane %v2689, 1
        %v2733 = vrot.slane %v2690, 1
        %v2734 = vsel %vm898, %v2732, %v2733
        %v2735 = vrot.slane %v2691, 1
        %v2736 = vrot.slane %v2692, 1
        %v2737 = vsel %vm898, %v2735, %v2736
        %v2738 = vrot.slane %v2693, 1
        %v2739 = vrot.slane %v2694, 1
        %v2740 = vsel %vm898, %v2738, %v2739
        %v2741 = vrot.slane %v2695, 1
        %v2742 = vrot.slane %v2696, 1
        %v2743 = vsel %vm898, %v2741, %v2742
        %v2744 = vrot.slane %v2697, 1
        %v2745 = vrot.slane %v2698, 1
        %v2746 = vsel %vm898, %v2744, %v2745
        %2747 = vrot.lane.b32.xlu0 %v2701, 32
        %v2748 = vpop.permute.xlu0 %2747
        %2749 = vrot.lane.b32.xlu0 %v2704, 32
        %v2750 = vpop.permute.xlu0 %2749
        %2751 = vrot.lane.b32.xlu0 %v2707, 32
        %v2752 = vpop.permute.xlu0 %2751
        %2753 = vrot.lane.b32.xlu0 %v2710, 32
        %v2754 = vpop.permute.xlu0 %2753
        %2755 = vrot.lane.b32.xlu0 %v2713, 32
        %v2756 = vpop.permute.xlu0 %2755
        %2757 = vrot.lane.b32.xlu0 %v2716, 32
        %v2758 = vpop.permute.xlu0 %2757
        %2759 = vrot.lane.b32.xlu0 %v2719, 32
        %v2760 = vpop.permute.xlu0 %2759
        %2761 = vrot.lane.b32.xlu0 %v2722, 32
        %v2762 = vpop.permute.xlu0 %2761
        %2763 = vrot.lane.b32.xlu0 %v2725, 32
        %v2764 = vpop.permute.xlu0 %2763
        %2765 = vrot.lane.b32.xlu0 %v2728, 32
        %v2766 = vpop.permute.xlu0 %2765
        %2767 = vrot.lane.b32.xlu0 %v2731, 32
        %v2768 = vpop.permute.xlu0 %2767
        %2769 = vrot.lane.b32.xlu0 %v2734, 32
        %v2770 = vpop.permute.xlu0 %2769
        %2771 = vrot.lane.b32.xlu0 %v2737, 32
        %v2772 = vpop.permute.xlu0 %2771
        %2773 = vrot.lane.b32.xlu0 %v2740, 32
        %v2774 = vpop.permute.xlu0 %2773
        %2775 = vrot.lane.b32.xlu0 %v2743, 32
        %v2776 = vpop.permute.xlu0 %2775
        %2777 = vrot.lane.b32.xlu0 %v2746, 32
        %v2778 = vpop.permute.xlu0 %2777
        %vm2795 = vcmask 294144
        %2796 = vst.msk [vmem:[#allocation2] sm:$0xff] %vm2795, %v2748
        %2797 = vst.msk [vmem:[#allocation2 + $0x8] sm:$0xff] %vm2795, %v2750
        %2798 = vst.msk [vmem:[#allocation2 + $0x10] sm:$0xff] %vm2795, %v2752
        %2799 = vst.msk [vmem:[#allocation2 + $0x18] sm:$0xff] %vm2795, %v2754
        %2800 = vst.msk [vmem:[#allocation2 + $0x20] sm:$0xff] %vm2795, %v2756
        %2801 = vst.msk [vmem:[#allocation2 + $0x28] sm:$0xff] %vm2795, %v2758
        %2802 = vst.msk [vmem:[#allocation2 + $0x30] sm:$0xff] %vm2795, %v2760
        %2803 = vst.msk [vmem:[#allocation2 + $0x38] sm:$0xff] %vm2795, %v2762
        %2804 = vst.msk [vmem:[#allocation2 + $0x40] sm:$0xff] %vm2795, %v2764
        %2805 = vst.msk [vmem:[#allocation2 + $0x48] sm:$0xff] %vm2795, %v2766
        %2806 = vst.msk [vmem:[#allocation2 + $0x50] sm:$0xff] %vm2795, %v2768
        %2807 = vst.msk [vmem:[#allocation2 + $0x58] sm:$0xff] %vm2795, %v2770
        %2808 = vst.msk [vmem:[#allocation2 + $0x60] sm:$0xff] %vm2795, %v2772
        %2809 = vst.msk [vmem:[#allocation2 + $0x68] sm:$0xff] %vm2795, %v2774
        %2810 = vst.msk [vmem:[#allocation2 + $0x70] sm:$0xff] %vm2795, %v2776
        %2811 = vst.msk [vmem:[#allocation2 + $0x78] sm:$0xff] %vm2795, %v2778
        %v2812 = vld [vmem:[#allocation2] sm:$0xff]
        %v2813 = vld [vmem:[#allocation2 + $0x8] sm:$0xff]
        %v2814 = vld [vmem:[#allocation2 + $0x10] sm:$0xff]
        %v2815 = vld [vmem:[#allocation2 + $0x18] sm:$0xff]
        %v2816 = vld [vmem:[#allocation2 + $0x20] sm:$0xff]
        %v2817 = vld [vmem:[#allocation2 + $0x28] sm:$0xff]
        %v2818 = vld [vmem:[#allocation2 + $0x30] sm:$0xff]
        %v2819 = vld [vmem:[#allocation2 + $0x38] sm:$0xff]
        %v2820 = vld [vmem:[#allocation2 + $0x40] sm:$0xff]
        %v2821 = vld [vmem:[#allocation2 + $0x48] sm:$0xff]
        %v2822 = vld [vmem:[#allocation2 + $0x50] sm:$0xff]
        %v2823 = vld [vmem:[#allocation2 + $0x58] sm:$0xff]
        %v2824 = vld [vmem:[#allocation2 + $0x60] sm:$0xff]
        %v2825 = vld [vmem:[#allocation2 + $0x68] sm:$0xff]
        %v2826 = vld [vmem:[#allocation2 + $0x70] sm:$0xff]
        %v2827 = vld [vmem:[#allocation2 + $0x78] sm:$0xff]
        %v2828 = vld [vmem:[%s1] sm:$0xf]
        %v2829 = vld [vmem:[%s1 + $0x4] sm:$0xf]
        %v2830 = vld [vmem:[%s1 + $0x8] sm:$0xf]
        %v2831 = vld [vmem:[%s1 + $0xc] sm:$0xf]
        %v2832 = vld [vmem:[%s1 + $0x10] sm:$0x3]
        %v2838 = vunpack.c.l.b16 %v2828
        %v2839 = vunpack.c.l.b16 %v2829
        %v2840 = vunpack.c.l.b16 %v2830
        %v2841 = vunpack.c.l.b16 %v2831
        %v2842 = vunpack.c.l.b16 %v2832
        %v2843 = vpack.c.b16 %v2839, %v2838
        %v2844 = vpack.c.b16 %v2841, %v2840
        %v2845 = vpack.c.b16 %v2842, %v2842
        %vm2848 = vcmask 293888
        %v2850 = vsel %vm2848, %v2812, 0
        %v2853 = vsel %vm2848, %v2813, 0
        %v2856 = vsel %vm2848, %v2814, 0
        %v2859 = vsel %vm2848, %v2815, 0
        %v2862 = vsel %vm2848, %v2816, 0
        %v2865 = vsel %vm2848, %v2817, 0
        %v2868 = vsel %vm2848, %v2818, 0
        %v2871 = vsel %vm2848, %v2819, 0
        %v2874 = vsel %vm2848, %v2820, 0
        %v2877 = vsel %vm2848, %v2821, 0
        %v2880 = vsel %vm2848, %v2822, 0
        %v2883 = vsel %vm2848, %v2823, 0
        %v2886 = vsel %vm2848, %v2824, 0
        %v2889 = vsel %vm2848, %v2825, 0
        %v2892 = vsel %vm2848, %v2826, 0
        %v2895 = vsel %vm2848, %v2827, 0
        %vm2897 = vcmask 1041408
        %v2899 = vsel %vm2897, %v2845, 0
        %2901 = vmatprep.subr.bf16.mxu0 0
        %2902 = vmatpush1.bf16.msra.mxu0 %v2843
        %2903 = vmatprep.subr.bf16.mxu0 0
        %2904 = vmatpush1.bf16.msra.mxu0 %v2844
        %2905 = vmatprep.subr.bf16.mxu0 0
        %2906 = vmatpush1.bf16.msra.mxu0 %v2899
        %2907 = vmatprep.subr.bf16.mxu0 0
        %2908 = vmatpush1.bf16.msra.mxu0 0
        %2909 = vmatprep.subr.bf16.mxu0 0
        %2910 = vmatpush1.bf16.msra.mxu0 0
        %2911 = vmatprep.subr.bf16.mxu0 0
        %2912 = vmatpush1.bf16.msra.mxu0 0
        %2913 = vmatprep.subr.bf16.mxu0 0
        %2914 = vmatpush1.bf16.msra.mxu0 0
        %2915 = vmatprep.subr.bf16.mxu0 0
        %2916 = vmatpush1.bf16.msra.mxu0 0
        %2917 = vmatprep.subr.bf16.mxu0 0
        %2918 = vmatpush1.bf16.msra.mxu0 0
        %2919 = vmatprep.subr.bf16.mxu0 0
        %2920 = vmatpush1.bf16.msra.mxu0 0
        %2921 = vmatprep.subr.bf16.mxu0 0
        %2922 = vmatpush1.bf16.msra.mxu0 0
        %2923 = vmatprep.subr.bf16.mxu0 0
        %2924 = vmatpush1.bf16.msra.mxu0 0
        %2925 = vmatprep.subr.bf16.mxu0 0
        %2926 = vmatpush1.bf16.msra.mxu0 0
        %2927 = vmatprep.subr.bf16.mxu0 0
        %2928 = vmatpush1.bf16.msra.mxu0 0
        %2929 = vmatprep.subr.bf16.mxu0 0
        %2930 = vmatpush1.bf16.msra.mxu0 0
        %2931 = vmatprep.subr.bf16.mxu0 0
        %2932 = vmatpush1.bf16.msra.mxu0 0
        %2933 = vmatprep.mubr.bf16.mxu0 0
        %2934 = vmatmul.mubr.bf16.gmra.mrb[0].mxu0 %v2850
        %v2935 = vpop.f32.mrb[0].mxu0
        %v2936 = vadd.f32 0.0, %v2935
        %v2937 = vpop.f32.mrb[0].mxu0
        %v2938 = vpop.f32.mrb[0].mxu0
        %v2939 = vadd.f32 0.0, %v2938
        %v2940 = vpop.f32.mrb[0].mxu0
        %2941 = vmatprep.mubr.bf16.mxu0 0
        %2942 = vmatmul.mubr.bf16.gmra.mrb[0].mxu0 %v2853
        %v2943 = vpop.f32.mrb[0].mxu0
        %v2944 = vadd.f32 0.0, %v2943
        %v2945 = vpop.f32.mrb[0].mxu0
        %v2946 = vpop.f32.mrb[0].mxu0
        %v2947 = vadd.f32 0.0, %v2946
        %v2948 = vpop.f32.mrb[0].mxu0
        %2949 = vmatprep.mubr.bf16.mxu0 0
        %2950 = vmatmul.mubr.bf16.gmra.mrb[0].mxu0 %v2856
        %v2951 = vpop.f32.mrb[0].mxu0
        %v2952 = vadd.f32 0.0, %v2951
        %v2953 = vpop.f32.mrb[0].mxu0
        %v2954 = vpop.f32.mrb[0].mxu0
        %v2955 = vadd.f32 0.0, %v2954
        %v2956 = vpop.f32.mrb[0].mxu0
        %2957 = vmatprep.mubr.bf16.mxu0 0
        %2958 = vmatmul.mubr.bf16.gmra.mrb[0].mxu0 %v2859
        %v2959 = vpop.f32.mrb[0].mxu0
        %v2960 = vadd.f32 0.0, %v2959
        %v2961 = vpop.f32.mrb[0].mxu0
        %v2962 = vpop.f32.mrb[0].mxu0
        %v2963 = vadd.f32 0.0, %v2962
        %v2964 = vpop.f32.mrb[0].mxu0
        %2965 = vmatprep.mubr.bf16.mxu0 0
        %2966 = vmatmul.mubr.bf16.gmra.mrb[0].mxu0 %v2862
        %v2967 = vpop.f32.mrb[0].mxu0
        %v2968 = vadd.f32 0.0, %v2967
        %v2969 = vpop.f32.mrb[0].mxu0
        %v2970 = vpop.f32.mrb[0].mxu0
        %v2971 = vadd.f32 0.0, %v2970
        %v2972 = vpop.f32.mrb[0].mxu0
        %2973 = vmatprep.mubr.bf16.mxu0 0
        %2974 = vmatmul.mubr.bf16.gmra.mrb[0].mxu0 %v2865
        %v2975 = vpop.f32.mrb[0].mxu0
        %v2976 = vadd.f32 0.0, %v2975
        %v2977 = vpop.f32.mrb[0].mxu0
        %v2978 = vpop.f32.mrb[0].mxu0
        %v2979 = vadd.f32 0.0, %v2978
        %v2980 = vpop.f32.mrb[0].mxu0
        %2981 = vmatprep.mubr.bf16.mxu0 0
        %2982 = vmatmul.mubr.bf16.gmra.mrb[0].mxu0 %v2868
        %v2983 = vpop.f32.mrb[0].mxu0
        %v2984 = vadd.f32 0.0, %v2983
        %v2985 = vpop.f32.mrb[0].mxu0
        %v2986 = vpop.f32.mrb[0].mxu0
        %v2987 = vadd.f32 0.0, %v2986
        %v2988 = vpop.f32.mrb[0].mxu0
        %2989 = vmatprep.mubr.bf16.mxu0 0
        %2990 = vmatmul.mubr.bf16.gmra.mrb[0].mxu0 %v2871
        %v2991 = vpop.f32.mrb[0].mxu0
        %v2992 = vadd.f32 0.0, %v2991
        %v2993 = vpop.f32.mrb[0].mxu0
        %v2994 = vpop.f32.mrb[0].mxu0
        %v2995 = vadd.f32 0.0, %v2994
        %v2996 = vpop.f32.mrb[0].mxu0
        %2997 = vmatprep.mubr.bf16.mxu0 0
        %2998 = vmatmul.mubr.bf16.gmra.mrb[0].mxu0 %v2874
        %v2999 = vpop.f32.mrb[0].mxu0
        %v3000 = vadd.f32 0.0, %v2999
        %v3001 = vpop.f32.mrb[0].mxu0
        %v3002 = vpop.f32.mrb[0].mxu0
        %v3003 = vadd.f32 0.0, %v3002
        %v3004 = vpop.f32.mrb[0].mxu0
        %3005 = vmatprep.mubr.bf16.mxu0 0
        %3006 = vmatmul.mubr.bf16.gmra.mrb[0].mxu0 %v2877
        %v3007 = vpop.f32.mrb[0].mxu0
        %v3008 = vadd.f32 0.0, %v3007
        %v3009 = vpop.f32.mrb[0].mxu0
        %v3010 = vpop.f32.mrb[0].mxu0
        %v3011 = vadd.f32 0.0, %v3010
        %v3012 = vpop.f32.mrb[0].mxu0
        %3013 = vmatprep.mubr.bf16.mxu0 0
        %3014 = vmatmul.mubr.bf16.gmra.mrb[0].mxu0 %v2880
        %v3015 = vpop.f32.mrb[0].mxu0
        %v3016 = vadd.f32 0.0, %v3015
        %v3017 = vpop.f32.mrb[0].mxu0
        %v3018 = vpop.f32.mrb[0].mxu0
        %v3019 = vadd.f32 0.0, %v3018
        %v3020 = vpop.f32.mrb[0].mxu0
        %3021 = vmatprep.mubr.bf16.mxu0 0
        %3022 = vmatmul.mubr.bf16.gmra.mrb[0].mxu0 %v2883
        %v3023 = vpop.f32.mrb[0].mxu0
        %v3024 = vadd.f32 0.0, %v3023
        %v3025 = vpop.f32.mrb[0].mxu0
        %v3026 = vpop.f32.mrb[0].mxu0
        %v3027 = vadd.f32 0.0, %v3026
        %v3028 = vpop.f32.mrb[0].mxu0
        %3029 = vmatprep.mubr.bf16.mxu0 0
        %3030 = vmatmul.mubr.bf16.gmra.mrb[0].mxu0 %v2886
        %v3031 = vpop.f32.mrb[0].mxu0
        %v3032 = vadd.f32 0.0, %v3031
        %v3033 = vpop.f32.mrb[0].mxu0
        %v3034 = vpop.f32.mrb[0].mxu0
        %v3035 = vadd.f32 0.0, %v3034
        %v3036 = vpop.f32.mrb[0].mxu0
        %3037 = vmatprep.mubr.bf16.mxu0 0
        %3038 = vmatmul.mubr.bf16.gmra.mrb[0].mxu0 %v2889
        %v3039 = vpop.f32.mrb[0].mxu0
        %v3040 = vadd.f32 0.0, %v3039
        %v3041 = vpop.f32.mrb[0].mxu0
        %v3042 = vpop.f32.mrb[0].mxu0
        %v3043 = vadd.f32 0.0, %v3042
        %v3044 = vpop.f32.mrb[0].mxu0
        %3045 = vmatprep.mubr.bf16.mxu0 0
        %3046 = vmatmul.mubr.bf16.gmra.mrb[0].mxu0 %v2892
        %v3047 = vpop.f32.mrb[0].mxu0
        %v3048 = vadd.f32 0.0, %v3047
        %v3049 = vpop.f32.mrb[0].mxu0
        %v3050 = vpop.f32.mrb[0].mxu0
        %v3051 = vadd.f32 0.0, %v3050
        %v3052 = vpop.f32.mrb[0].mxu0
        %3053 = vmatprep.mubr.bf16.mxu0 0
        %3054 = vmatmul.mubr.bf16.gmra.mrb[0].mxu0 %v2895
        %v3055 = vpop.f32.mrb[0].mxu0
        %v3056 = vadd.f32 0.0, %v3055
        %v3057 = vpop.f32.mrb[0].mxu0
        %v3058 = vpop.f32.mrb[0].mxu0
        %v3059 = vadd.f32 0.0, %v3058
        %v3060 = vpop.f32.mrb[0].mxu0
        %3061 = vdwg.mxu0
        %v3062 = vadd.f32 %v2936, %v2939
        %v3063 = vadd.f32 %v3062, %v2944
        %v3064 = vadd.f32 %v3063, %v2947
        %v3065 = vadd.f32 %v3064, %v2952
        %v3066 = vadd.f32 %v3065, %v2955
        %v3067 = vadd.f32 %v3066, %v2960
        %v3068 = vadd.f32 %v3067, %v2963
        %v3069 = vadd.f32 %v3068, %v2968
        %v3070 = vadd.f32 %v3069, %v2971
        %v3071 = vadd.f32 %v3070, %v2976
        %v3072 = vadd.f32 %v3071, %v2979
        %v3073 = vadd.f32 %v3072, %v2984
        %v3074 = vadd.f32 %v3073, %v2987
        %v3075 = vadd.f32 %v3074, %v2992
        %v3076 = vadd.f32 %v3075, %v2995
        %v3077 = vadd.f32 %v3076, %v3000
        %v3078 = vadd.f32 %v3077, %v3003
        %v3079 = vadd.f32 %v3078, %v3008
        %v3080 = vadd.f32 %v3079, %v3011
        %v3081 = vadd.f32 %v3080, %v3016
        %v3082 = vadd.f32 %v3081, %v3019
        %v3083 = vadd.f32 %v3082, %v3024
        %v3084 = vadd.f32 %v3083, %v3027
        %v3085 = vadd.f32 %v3084, %v3032
        %v3086 = vadd.f32 %v3085, %v3035
        %v3087 = vadd.f32 %v3086, %v3040
        %v3088 = vadd.f32 %v3087, %v3043
        %v3089 = vadd.f32 %v3088, %v3048
        %v3090 = vadd.f32 %v3089, %v3051
        %v3091 = vadd.f32 %v3090, %v3056
        %v3092 = vadd.f32 %v3091, %v3059
        %v3093 = vrot.slane %v3092, 4
        %v3094 = vadd.f32 %v3092, %v3093
        %v3095 = vrot.slane %v3094, 2
        %v3096 = vadd.f32 %v3094, %v3095
        %v3097 = vrot.slane %v3096, 1
        %v3098 = vadd.f32 %v3096, %v3097
        %v3099 = vmul.f32 %v3098, 0.00390625
        %v3100 = vsub.f32 %v2936, %v3099
        %v3101 = vsub.f32 %v2939, %v3099
        %v3102 = vsub.f32 %v2944, %v3099
        %v3103 = vsub.f32 %v2947, %v3099
        %v3104 = vsub.f32 %v2952, %v3099
        %v3105 = vsub.f32 %v2955, %v3099
        %v3106 = vsub.f32 %v2960, %v3099
        %v3107 = vsub.f32 %v2963, %v3099
        %v3108 = vsub.f32 %v2968, %v3099
        %v3109 = vsub.f32 %v2971, %v3099
        %v3110 = vsub.f32 %v2976, %v3099
        %v3111 = vsub.f32 %v2979, %v3099
        %v3112 = vsub.f32 %v2984, %v3099
        %v3113 = vsub.f32 %v2987, %v3099
        %v3114 = vsub.f32 %v2992, %v3099
        %v3115 = vsub.f32 %v2995, %v3099
        %v3116 = vsub.f32 %v3000, %v3099
        %v3117 = vsub.f32 %v3003, %v3099
        %v3118 = vsub.f32 %v3008, %v3099
        %v3119 = vsub.f32 %v3011, %v3099
        %v3120 = vsub.f32 %v3016, %v3099
        %v3121 = vsub.f32 %v3019, %v3099
        %v3122 = vsub.f32 %v3024, %v3099
        %v3123 = vsub.f32 %v3027, %v3099
        %v3124 = vsub.f32 %v3032, %v3099
        %v3125 = vsub.f32 %v3035, %v3099
        %v3126 = vsub.f32 %v3040, %v3099
        %v3127 = vsub.f32 %v3043, %v3099
        %v3128 = vsub.f32 %v3048, %v3099
        %v3129 = vsub.f32 %v3051, %v3099
        %v3130 = vsub.f32 %v3056, %v3099
        %v3131 = vsub.f32 %v3059, %v3099
        %v3132 = vmul.f32 %v3100, %v3100
        %v3133 = vmul.f32 %v3101, %v3101
        %v3134 = vmul.f32 %v3102, %v3102
        %v3135 = vmul.f32 %v3103, %v3103
        %v3136 = vmul.f32 %v3104, %v3104
        %v3137 = vmul.f32 %v3105, %v3105
        %v3138 = vmul.f32 %v3106, %v3106
        %v3139 = vmul.f32 %v3107, %v3107
        %v3140 = vmul.f32 %v3108, %v3108
        %v3141 = vmul.f32 %v3109, %v3109
        %v3142 = vmul.f32 %v3110, %v3110
        %v3143 = vmul.f32 %v3111, %v3111
        %v3144 = vmul.f32 %v3112, %v3112
        %v3145 = vmul.f32 %v3113, %v3113
        %v3146 = vmul.f32 %v3114, %v3114
        %v3147 = vmul.f32 %v3115, %v3115
        %v3148 = vmul.f32 %v3116, %v3116
        %v3149 = vmul.f32 %v3117, %v3117
        %v3150 = vmul.f32 %v3118, %v3118
        %v3151 = vmul.f32 %v3119, %v3119
        %v3152 = vmul.f32 %v3120, %v3120
        %v3153 = vmul.f32 %v3121, %v3121
        %v3154 = vmul.f32 %v3122, %v3122
        %v3155 = vmul.f32 %v3123, %v3123
        %v3156 = vmul.f32 %v3124, %v3124
        %v3157 = vmul.f32 %v3125, %v3125
        %v3158 = vmul.f32 %v3126, %v3126
        %v3159 = vmul.f32 %v3127, %v3127
        %v3160 = vmul.f32 %v3128, %v3128
        %v3161 = vmul.f32 %v3129, %v3129
        %v3162 = vmul.f32 %v3130, %v3130
        %v3163 = vmul.f32 %v3131, %v3131
        %v3164 = vadd.f32 %v3132, %v3133
        %v3165 = vadd.f32 %v3164, %v3134
        %v3166 = vadd.f32 %v3165, %v3135
        %v3167 = vadd.f32 %v3166, %v3136
        %v3168 = vadd.f32 %v3167, %v3137
        %v3169 = vadd.f32 %v3168, %v3138
        %v3170 = vadd.f32 %v3169, %v3139
        %v3171 = vadd.f32 %v3170, %v3140
        %v3172 = vadd.f32 %v3171, %v3141
        %v3173 = vadd.f32 %v3172, %v3142
        %v3174 = vadd.f32 %v3173, %v3143
        %v3175 = vadd.f32 %v3174, %v3144
        %v3176 = vadd.f32 %v3175, %v3145
        %v3177 = vadd.f32 %v3176, %v3146
        %v3178 = vadd.f32 %v3177, %v3147
        %v3179 = vadd.f32 %v3178, %v3148
        %v3180 = vadd.f32 %v3179, %v3149
        %v3181 = vadd.f32 %v3180, %v3150
        %v3182 = vadd.f32 %v3181, %v3151
        %v3183 = vadd.f32 %v3182, %v3152
        %v3184 = vadd.f32 %v3183, %v3153
        %v3185 = vadd.f32 %v3184, %v3154
        %v3186 = vadd.f32 %v3185, %v3155
        %v3187 = vadd.f32 %v3186, %v3156
        %v3188 = vadd.f32 %v3187, %v3157
        %v3189 = vadd.f32 %v3188, %v3158
        %v3190 = vadd.f32 %v3189, %v3159
        %v3191 = vadd.f32 %v3190, %v3160
        %v3192 = vadd.f32 %v3191, %v3161
        %v3193 = vadd.f32 %v3192, %v3162
        %v3194 = vadd.f32 %v3193, %v3163
        %v3195 = vrot.slane %v3194, 4
        %v3196 = vadd.f32 %v3194, %v3195
        %v3197 = vrot.slane %v3196, 2
        %v3198 = vadd.f32 %v3196, %v3197
        %v3199 = vrot.slane %v3198, 1
        %v3200 = vadd.f32 %v3198, %v3199
        %3201 = vst [vmem:[%s136] sm:$0x1] %v3098
        %3202 = vst [vmem:[%s136 + $0x1] sm:$0x1] %v3200
        %s3203 = sand.u32 %s71, 1
        %s3204 = scalar_lea.sflag [#allocation4], %s3203
        %s3205 = sand.u32 %s71, 1
        %s3206 = smul.addr %s3205, 2
        %s3207 = scalar_lea.vmem [#allocation3], %s3206
        // Predicated region
        $region29: #{tpu_custom_call.1} parent=27 // pred_check
          %p3208 = pneg %p81
        $region30: #{tpu_custom_call.1} parent=27 // pred_check_branch
          %3210 = sbr.rel (%p3208) target = $region32
        $region31: #{tpu_custom_call.1} parent=27 // pred_region
          %s3212 = ssub.s32 32, 32
          %3213 = vsyncadd %s3204, %s3212
          %s3214 = smul.addr %s16, 32
          %s3215 = scalar_lea.hbm %s2, %s3214
          %s3217 = sshll.u32 %s3207, 4
          %s3218 = int_to_ptr.vmem [resolvable:$true] %s3217
          %3220 = dma.vmem_to_hbm [thread:$0]  %s3218, 32, %s3215, %s3204
        $region32: #{tpu_custom_call.1} parent=27 // pred_fallthru
          _
      $region28: #{tpu_custom_call.1} parent=5 // pred_fallthru
        _
      %p3221 = scmp.le.s32.totalorder 2, %s11
      // Predicated region
      $region33: #{tpu_custom_call.1} parent=5 // pred_check
        %p3222 = pneg %p3221
      $region34: #{tpu_custom_call.1} parent=5 // pred_check_branch
        %3224 = sbr.rel (%p3222) target = $region36
      $region35: #{tpu_custom_call.1} parent=5 // pred_region
        %s3225 = ssub.s32 %s11, 2
        // Predicated region
        $region37: #{tpu_custom_call.1} parent=35 // pred_check
          %p3226 = pneg %p87
        $region38: #{tpu_custom_call.1} parent=35 // pred_check_branch
          %3228 = sbr.rel (%p3226) target = $region40
        $region39: #{tpu_custom_call.1} parent=35 // pred_region
          %s3229 = sand.u32 %s72, 1
          %s3230 = scalar_lea.sflag [#allocation4], %s3229
          %s3231 = sand.u32 %s72, 1
          %s3232 = smul.addr %s3231, 2
          %s3233 = scalar_lea.vmem [#allocation3], %s3232
          %3234 = dma.done %s3230, 32
        $region40: #{tpu_custom_call.1} parent=35 // pred_fallthru
          _
      $region36: #{tpu_custom_call.1} parent=5 // pred_fallthru
        _
    $region6: #{tpu_custom_call.1} parent=1 // loop_footer
      %s15 = sadd.s32 1, %s11
    $region7: #{tpu_custom_call.1} parent=1 // loop_footer_branch
      %10 = sbr.rel target = $region3
    $region8: #{tpu_custom_call.1} parent=1 // loop_exit
      _
    %3235 = vsyncpa [#allocation4], 1
    %s3236 = scalar_lea.sflag [#allocation4], 1
    %3237 = vsyncpa %s3236, 1

</llo_original>
